<compile_context>
chip_gen: v6e
topology: v6e:2x2x1
jax: 0.10.0
libtpu: 0.0.40
codegen_flags: <defaults>
</compile_context>

<pallas_src>
import functools

import jax
import jax.numpy as jnp
from jax.experimental import pallas as pl
from jax.experimental.pallas import tpu as pltpu

_EPS = 1e-5
_LANES = 128
_SUBLANES = 8
_FULL_IM2COL_MAX_K = 256       # full im2col (single dot) when k*k*Cin <= this
_TARGET_TILE_POSITIONS = 512   # target output positions per M-tile


def _round_up(x, m):
    return (x + m - 1) // m * m


def _physical_vmem_bytes():
    cap = 64 * 1024 * 1024      # conservative default (v7x per-TC VMEM)
    try:
        cap = int(getattr(pltpu.get_tpu_info(), "vmem_capacity_bytes", cap))
    except Exception:
        pass
    return cap


def _preferred_tn():
    """256-wide N tiles on v6e/v7x (2x256 MXU); 128 on v5e/v5p (128-wide MXU)."""
    try:
        kind = jax.devices()[0].device_kind.lower()
    except Exception:
        kind = ""
    if "v5" in kind:
        return 128
    return 256


# ----------------------------------------------------------------------------
# Fused conv + folded-BN (+ residual) (+ ReLU) Pallas kernel
# ----------------------------------------------------------------------------
def _conv_bn_act_kernel(x_ref, w_ref, b_ref, *rest,
                        groups, tm, wo_pad, relu, has_res):
    """out = [relu]( sum_g x_slab[group_g] @ w[g] + bias [+ residual] ).

    BN scale is pre-folded into w; bias is the folded BN shift.
    x_ref : (P, Mt_ext, Kc) bf16  per-parity channel-concat slab (with halo rows)
    w_ref : (G, Kc, TN)     bf16  per-group weight matrices
    b_ref : (1, TN)         f32   folded BatchNorm shift
    rest  : [res_ref (TM, TN) bf16,] o_ref (TM, TN)
    """
    if has_res:
        res_ref, o_ref = rest
    else:
        (o_ref,) = rest

    acc = None
    for g, (p_idx, roff) in enumerate(groups):
        start = roff * wo_pad                               # multiple of 8
        a = x_ref[p_idx, start:start + tm, :]               # static slice
        d = jnp.dot(a, w_ref[g], preferred_element_type=jnp.float32)
        acc = d if acc is None else acc + d

    out = acc + b_ref[...]                                  # folded BN shift
    if has_res:
        out = out + res_ref[...].astype(jnp.float32)        # fused skip connection
    if relu:
        out = jnp.maximum(out, 0.0)
    o_ref[...] = out.astype(o_ref.dtype)


def _slab_slice(xp, r0, c0, stride, nrows, ncols):
    """xp[:, r0::stride, c0::stride, :] cropped / zero-padded to (nrows, ncols)."""
    s = xp[:, r0::stride, c0::stride, :][:, :nrows, :ncols, :]
    pr, pc = nrows - s.shape[1], ncols - s.shape[2]
    if pr or pc:
        s = jnp.pad(s, ((0, 0), (0, pr), (0, pc), (0, 0)))
    return s


def conv_bn_act(x, p, *, ksize, stride, padding, relu, residual=None,
                out_dtype=jnp.bfloat16):
    """Fused Conv2d(k, stride, padding, bias=False) + folded BN [+ res] [+ ReLU].

    x        : (B, H, W, Cin) NHWC activation (cast to bf16 internally).
    p        : {"w": (k, k, Cin, Np) bf16 (BN scale folded), "bias": (1, Np) f32}
    residual : optional (B, Ho, Wo, Np), added after the BN affine, before ReLU.
    returns  : (B, Ho, Wo, Np); channels >= true out_ch are exactly 0.
    """
    B, H, W, Cin = x.shape
    w4 = p["w"]
    assert w4.shape[:3] == (ksize, ksize, Cin), (w4.shape, ksize, Cin)
    Np = w4.shape[3]
    Ho = (H + 2 * padding - ksize) // stride + 1
    Wo = (W + 2 * padding - ksize) // stride + 1

    xb = x.astype(jnp.bfloat16)
    xp = (jnp.pad(xb, ((0, 0), (padding, padding), (padding, padding), (0, 0)))
          if padding else xb)

    full = ksize * ksize * Cin <= _FULL_IM2COL_MAX_K
    if full:
        # Full im2col: one MXU dot with K = k*k*Cin (fixes tiny-Cin starvation).
        parts = [_slab_slice(xp, dy, dx, stride, Ho, Wo)
                 for dy in range(ksize) for dx in range(ksize)]
        slab = jnp.concatenate(parts, axis=-1)[:, None]      # (B, 1, Ho, Wo, Kc)
        groups = ((0, 0),)
        ext = 0
        wk = w4.reshape(1, ksize * ksize * Cin, Np)
    else:
        # Channel-concat over dx: one dot per dy with K = k*Cin; row taps of the
        # same parity share a slab (row shift only) -> accumulation is mostly
        # inside the MXU contraction.
        ext = (ksize - 1) // stride
        Hs = ext + Ho
        n_par = min(stride, ksize)
        slabs = []
        for pr in range(n_par):
            parts = [_slab_slice(xp, pr, dx, stride, Hs, Wo) for dx in range(ksize)]
            slabs.append(jnp.concatenate(parts, axis=-1))
        slab = jnp.stack(slabs, axis=1)                      # (B, P, Hs, Wo, k*Cin)
        groups = tuple((dy % stride, dy // stride) for dy in range(ksize))
        wk = w4.reshape(ksize, ksize * Cin, Np)

    P = slab.shape[1]
    Kc = slab.shape[-1]
    G = len(groups)
    wk = wk.astype(jnp.bfloat16)

    # ---- spatial (M) tiling: th output rows per tile, with `ext` halo rows
    Wo_pad = _round_up(Wo, _SUBLANES)                        # sublane-aligned rows
    th = max(1, min(Ho, _TARGET_TILE_POSITIONS // Wo_pad))
    n_mt = pl.cdiv(Ho, th)
    Ho_pad = n_mt * th
    tm = th * Wo_pad
    mt_ext = (th + ext) * Wo_pad

    slab = jnp.pad(slab, ((0, 0), (0, 0),
                          (0, Ho_pad + ext - slab.shape[2]),
                          (0, Wo_pad - Wo), (0, 0)))
    tiles = [slab[:, :, k * th:k * th + th + ext] for k in range(n_mt)]
    xg = jnp.stack(tiles, axis=1).reshape(B, n_mt, P, mt_ext, Kc)

    # ---- output-channel tiling (lane-dense; 256 on v6e/v7x when it divides Np)
    tn = _preferred_tn()
    if Np % tn:
        tn = _LANES
    n_tn = Np // tn

    has_res = residual is not None
    if has_res:
        assert residual.shape == (B, Ho, Wo, Np), (residual.shape, (B, Ho, Wo, Np))
        res = jnp.pad(residual.astype(jnp.bfloat16),
                      ((0, 0), (0, Ho_pad - Ho), (0, Wo_pad - Wo), (0, 0)))
        res = res.reshape(B, n_mt, tm, Np)

    # ---- grid order: keep the bigger operand resident (slab reuse vs weights)
    if n_tn <= 1:
        j_outer = False
    else:
        slab_tile_b = P * mt_ext * Kc * 2
        w_tile_b = G * Kc * tn * 2
        steps_bm = B * n_mt
        cost_inner = steps_bm * slab_tile_b + steps_bm * n_tn * w_tile_b
        cost_outer = n_tn * steps_bm * slab_tile_b + n_tn * w_tile_b
        j_outer = cost_outer < cost_inner

    def order(f):
        if j_outer:
            return lambda j, b, m: f(b, m, j)
        return f

    in_specs = [
        pl.BlockSpec((None, None, P, mt_ext, Kc),
                     order(lambda b, m, j: (b, m, 0, 0, 0))),
        pl.BlockSpec((G, Kc, tn), order(lambda b, m, j: (0, 0, j))),
        pl.BlockSpec((1, tn), order(lambda b, m, j: (0, j))),
    ]
    args = [xg, wk, p["bias"]]
    if has_res:
        in_specs.append(pl.BlockSpec((None, None, tm, tn),
                                     order(lambda b, m, j: (b, m, 0, j))))
        args.append(res)
    out_spec = pl.BlockSpec((None, None, tm, tn),
                            order(lambda b, m, j: (b, m, 0, j)))

    # ---- VMEM budget derived from actual block bytes (valid on 64 MiB v7x)
    out_isize = jnp.dtype(out_dtype).itemsize
    block_bytes = (P * mt_ext * Kc * 2 + G * Kc * tn * 2 + tn * 4
                   + tm * tn * out_isize + (tm * tn * 2 if has_res else 0))
    vmem_limit = int(min(max(2 * block_bytes + (8 << 20), 24 << 20),
                         int(0.75 * _physical_vmem_bytes())))

    grid = (n_tn, B, n_mt) if j_outer else (B, n_mt, n_tn)

    out = pl.pallas_call(
        functools.partial(_conv_bn_act_kernel, groups=groups, tm=tm,
                          wo_pad=Wo_pad, relu=relu, has_res=has_res),
        out_shape=jax.ShapeDtypeStruct((B, n_mt, tm, Np), out_dtype),
        grid_spec=pltpu.PrefetchScalarGridSpec(
            num_scalar_prefetch=0,
            grid=grid,
            in_specs=in_specs,
            out_specs=out_spec,
        ),
        compiler_params=pltpu.CompilerParams(
            dimension_semantics=("parallel", "parallel", "parallel"),
            vmem_limit_bytes=vmem_limit,
        ),
    )(*args)

    out = out.reshape(B, Ho_pad, Wo_pad, Np)[:, :Ho, :Wo, :]
    return out


# ----------------------------------------------------------------------------
# Deterministic synthetic parameters (shapes follow the PyTorch module)
# ----------------------------------------------------------------------------
def _fold_bn(key, out_ch):
    k1, k2, k3, k4 = jax.random.split(key, 4)
    gamma = 1.0 + 0.05 * jax.random.normal(k1, (out_ch,), jnp.float32)
    beta = 0.05 * jax.random.normal(k2, (out_ch,), jnp.float32)
    mean = 0.05 * jax.random.normal(k3, (out_ch,), jnp.float32)
    var = 1.0 + 0.05 * jnp.abs(jax.random.normal(k4, (out_ch,), jnp.float32))
    scale = gamma * jax.lax.rsqrt(var + _EPS)
    bias = beta - mean * scale
    return scale, bias


def _cnnblock_params(key, in_ch, out_ch, ksize, cin_pad, np_):
    """CNNBlock(in_ch, out_ch, ksize, bias=False) weights with BN scale folded.

    "w": (k, k, cin_pad, np_) bf16 — BN scale folded BEFORE zero-padding so
    padded output lanes / input rows stay exactly zero.  "bias": (1, np_) f32.
    """
    kw, kb = jax.random.split(key)
    fan_in = in_ch * ksize * ksize
    w = jax.random.normal(kw, (ksize, ksize, in_ch, out_ch), jnp.float32)
    w = w * (2.0 / fan_in) ** 0.5
    scale, bias = _fold_bn(kb, out_ch)
    w = w * scale[None, None, None, :]                       # fold BN scale
    w = jnp.pad(w, ((0, 0), (0, 0), (0, cin_pad - in_ch), (0, np_ - out_ch)))
    bias = jnp.pad(bias, (0, np_ - out_ch)).reshape(1, np_).astype(jnp.float32)
    return {"w": w.astype(jnp.bfloat16), "bias": bias}


def init_resblock_params(key, in_ch, out_ch, stride):
    np_ = _round_up(out_ch, _LANES)
    k1, k2, k3 = jax.random.split(key, 3)
    params = {
        "in_ch": in_ch, "out_ch": out_ch, "np": np_,
        # conv1: 3x3 / s1 / p1 + BN + ReLU
        "c1": _cnnblock_params(k1, in_ch, out_ch, 3, in_ch, np_),
        # conv2: 3x3 / stride / p1 + BN (ReLU only after the residual add)
        "c2": _cnnblock_params(k2, out_ch, out_ch, 3, np_, np_),
    }
    if stride == 2 or in_ch != out_ch:
        # convt: 1x1 projection shortcut + BN (is_trans=False)
        params["ct"] = _cnnblock_params(k3, in_ch, out_ch, 1, in_ch, np_)
    else:
        params["ct"] = None
    return params


# ----------------------------------------------------------------------------
# ResBlock forward (mirrors ResBlock.forward)
# ----------------------------------------------------------------------------
def res_block_forward(params, x_nchw, stride):
    """x_nchw: (B, C_in, H, W) like the PyTorch module; returns (B, C_out, Ho, Wo)."""
    x = jnp.transpose(x_nchw, (0, 2, 3, 1))                  # NHWC
    B, H, W, C = x.shape
    np_, out_ch = params["np"], params["out_ch"]
    assert C == params["in_ch"]

    # conv1: 3x3 stride 1 + BN + ReLU (full im2col path when C is tiny)
    y = conv_bn_act(x, params["c1"], ksize=3, stride=1, padding=1, relu=True)
    # shortcut: 1x1 projection (+BN) if stride==2 or in_ch!=out_ch, else identity
    if params["ct"] is not None:
        sc = conv_bn_act(x, params["ct"], ksize=1, stride=stride, padding=0,
                         relu=False)
    else:
        # TODO(synk): in a chained ResNet keep activations in the lane-padded
        # layout throughout to avoid this small pad copy.
        sc = jnp.pad(x.astype(jnp.bfloat16),
                     ((0, 0), (0, 0), (0, 0), (0, np_ - C)))
    # conv2: 3x3 stride s + BN, fused with (+= shortcut; ReLU); stored bf16
    y = conv_bn_act(y, params["c2"], ksize=3, stride=stride, padding=1,
                    relu=True, residual=sc)
    y = y[..., :out_ch].astype(jnp.float32)                  # drop lane padding
    return jnp.transpose(y, (0, 3, 1, 2))                    # back to NCHW


# ----------------------------------------------------------------------------
# Pure-XLA reference (numerical sanity check; uses the same folded weights)
# ----------------------------------------------------------------------------
def _ref_conv_bn(x, p, ksize, stride, padding, out_ch, relu):
    cin = x.shape[-1]
    w = p["w"].astype(jnp.float32)[:, :, :cin, :out_ch]
    y = jax.lax.conv_general_dilated(
        x, w, window_strides=(stride, stride),
        padding=[(padding, padding), (padding, padding)],
        dimension_numbers=("NHWC", "HWIO", "NHWC"))
    y = y + p["bias"][0, :out_ch]
    return jnp.maximum(y, 0.0) if relu else y


def res_block_reference(params, x_nchw, stride):
    x = jnp.transpose(x_nchw, (0, 2, 3, 1)).astype(jnp.float32)
    oc = params["out_ch"]
    y = _ref_conv_bn(x, params["c1"], 3, 1, 1, oc, True)
    y = _ref_conv_bn(y, params["c2"], 3, stride, 1, oc, False)
    sc = (_ref_conv_bn(x, params["ct"], 1, stride, 0, oc, False)
          if params["ct"] is not None else x)
    out = jnp.maximum(y + sc, 0.0)
    return jnp.transpose(out, (0, 3, 1, 2))


if __name__ == "__main__":
    key = jax.random.PRNGKey(0)
    kp1, kp2, kx = jax.random.split(key, 3)
    x = jax.random.normal(kx, (2, 4, 16, 16), jnp.float32)   # NCHW, like the module

    # ResBlock(4 -> 32, stride=2): projection (1x1 stride-2) shortcut path.
    p1 = init_resblock_params(kp1, in_ch=4, out_ch=32, stride=2)
    fwd1 = jax.jit(lambda inp: res_block_forward(p1, inp, 2))
    y1 = jax.block_until_ready(fwd1(x))
    r1 = res_block_reference(p1, x, 2)
    assert y1.shape == (2, 32, 8, 8), y1.shape
    assert bool(jnp.all(jnp.isfinite(y1)))
    err1 = float(jnp.max(jnp.abs(y1 - r1)))
    tol1 = 3e-2 * float(jnp.max(jnp.abs(r1))) + 0.1
    assert err1 < tol1, (err1, tol1)

    # ResBlock(32 -> 32, stride=1): identity-shortcut path (convt is None).
    p2 = init_resblock_params(kp2, in_ch=32, out_ch=32, stride=1)
    fwd2 = jax.jit(lambda inp: res_block_forward(p2, inp, 1))
    y2 = jax.block_until_ready(fwd2(y1))
    r2 = res_block_reference(p2, y1, 1)
    assert y2.shape == (2, 32, 8, 8), y2.shape
    assert bool(jnp.all(jnp.isfinite(y2)))
    err2 = float(jnp.max(jnp.abs(y2 - r2)))
    tol2 = 3e-2 * float(jnp.max(jnp.abs(r2))) + 0.1
    assert err2 < tol2, (err2, tol2)

    print("KERNEL_OK")
</pallas_src>

<mosaic_0001>
module attributes {stable_mosaic.version = 11 : i64} {
  func.func @_conv_bn_act_kernel(%arg0: i32, %arg1: i32, %arg2: i32, %arg3: memref<1x1x1x64x4xbf16, #tpu.memory_space<vmem>>, %arg4: memref<1x4x128xbf16, #tpu.memory_space<vmem>>, %arg5: memref<1x128xf32, #tpu.memory_space<vmem>>, %arg6: memref<1x1x64x128xbf16, #tpu.memory_space<vmem>>) attributes {dimension_semantics = [#tpu.dimension_semantics<parallel>, #tpu.dimension_semantics<parallel>, #tpu.dimension_semantics<parallel>], iteration_bounds = array<i64: 2, 1, 1>, scalar_prefetch = 0 : i64, scratch_operands = 0 : i64, tpu.core_type = #tpu.core_type<tc>, window_params = [{transform_indices = @transform_0, window_bounds = array<i64: 1, 1, 1, 64, 4>}, {transform_indices = @transform_1, window_bounds = array<i64: 1, 4, 128>}, {transform_indices = @transform_2, window_bounds = array<i64: 1, 128>}, {transform_indices = @transform_3, window_bounds = array<i64: 1, 1, 64, 128>}]} {
    %c0 = arith.constant 0 : index
    %c0_0 = arith.constant 0 : index
    %c0_1 = arith.constant 0 : index
    %c0_2 = arith.constant 0 : index
    %c0_3 = arith.constant 0 : index
    %0 = vector.load %arg3[%c0, %c0_0, %c0_1, %c0_2, %c0_3] : memref<1x1x1x64x4xbf16, #tpu.memory_space<vmem>>, vector<1x1x1x64x4xbf16>
    %1 = vector.shape_cast %0 : vector<1x1x1x64x4xbf16> to vector<64x4xbf16>
    %c0_4 = arith.constant 0 : index
    %c0_5 = arith.constant 0 : index
    %c0_6 = arith.constant 0 : index
    %2 = vector.load %arg4[%c0_4, %c0_5, %c0_6] : memref<1x4x128xbf16, #tpu.memory_space<vmem>>, vector<1x4x128xbf16>
    %3 = vector.shape_cast %2 : vector<1x4x128xbf16> to vector<4x128xbf16>
    %cst = arith.constant dense<0.000000e+00> : vector<64x128xf32>
    %4 = tpu.matmul %1, %3, %cst {dimension_numbers = #tpu.dot_dimension_numbers<[1], [0], [0], [1], [0, 0, 1, 1], [], []>} : vector<64x4xbf16>, vector<4x128xbf16>, vector<64x128xf32> -> vector<64x128xf32>
    %c0_7 = arith.constant 0 : index
    %c0_8 = arith.constant 0 : index
    %5 = vector.load %arg5[%c0_7, %c0_8] : memref<1x128xf32, #tpu.memory_space<vmem>>, vector<1x128xf32>
    %6 = vector.broadcast %5 : vector<1x128xf32> to vector<64x128xf32>
    %7 = arith.addf %4, %6 : vector<64x128xf32>
    %8 = arith.truncf %7 : vector<64x128xf32> to vector<64x128xbf16>
    %c0_9 = arith.constant 0 : index
    %c0_10 = arith.constant 0 : index
    %c0_11 = arith.constant 0 : index
    %c0_12 = arith.constant 0 : index
    %9 = vector.load %arg6[%c0_9, %c0_10, %c0_11, %c0_12] : memref<1x1x64x128xbf16, #tpu.memory_space<vmem>>, vector<1x1x64x128xbf16>
    %10 = vector.shape_cast %9 : vector<1x1x64x128xbf16> to vector<64x128xbf16>
    %11 = vector.shape_cast %8 : vector<64x128xbf16> to vector<1x1x64x128xbf16>
    tpu.vector_store %arg6[%c0_9, %c0_10, %c0_11, %c0_12], %11 {strides = array<i32>} : memref<1x1x64x128xbf16, #tpu.memory_space<vmem>>, vector<1x1x64x128xbf16>,
    return
  }
  func.func @transform_0(%arg0: i32, %arg1: i32, %arg2: i32) -> (i32, i32, i32, i32, i32) {
    %c0_i32 = arith.constant 0 : i32
    %c0_i32_0 = arith.constant 0 : i32
    %c0_i32_1 = arith.constant 0 : i32
    %c0_i32_2 = arith.constant 0 : i32
    return %arg0, %arg1, %c0_i32, %c0_i32_0, %c0_i32_1 : i32, i32, i32, i32, i32
  }
  func.func @transform_1(%arg0: i32, %arg1: i32, %arg2: i32) -> (i32, i32, i32) {
    %c0_i32 = arith.constant 0 : i32
    %c0_i32_0 = arith.constant 0 : i32
    %c0_i32_1 = arith.constant 0 : i32
    return %c0_i32, %c0_i32_0, %arg2 : i32, i32, i32
  }
  func.func @transform_2(%arg0: i32, %arg1: i32, %arg2: i32) -> (i32, i32) {
    %c0_i32 = arith.constant 0 : i32
    %c0_i32_0 = arith.constant 0 : i32
    return %c0_i32, %arg2 : i32, i32
  }
  func.func @transform_3(%arg0: i32, %arg1: i32, %arg2: i32) -> (i32, i32, i32, i32) {
    %c0_i32 = arith.constant 0 : i32
    %c0_i32_0 = arith.constant 0 : i32
    return %arg0, %arg1, %c0_i32, %arg2 : i32, i32, i32, i32
  }
}

module attributes {stable_mosaic.version = 11 : i64} {
  func.func @_conv_bn_act_kernel(%arg0: i32, %arg1: i32, %arg2: i32, %arg3: memref<1x1x1x256x36xbf16, #tpu.memory_space<vmem>>, %arg4: memref<1x36x128xbf16, #tpu.memory_space<vmem>>, %arg5: memref<1x128xf32, #tpu.memory_space<vmem>>, %arg6: memref<1x1x256x128xbf16, #tpu.memory_space<vmem>>) attributes {dimension_semantics = [#tpu.dimension_semantics<parallel>, #tpu.dimension_semantics<parallel>, #tpu.dimension_semantics<parallel>], iteration_bounds = array<i64: 2, 1, 1>, scalar_prefetch = 0 : i64, scratch_operands = 0 : i64, tpu.core_type = #tpu.core_type<tc>, window_params = [{transform_indices = @transform_0, window_bounds = array<i64: 1, 1, 1, 256, 36>}, {transform_indices = @transform_1, window_bounds = array<i64: 1, 36, 128>}, {transform_indices = @transform_2, window_bounds = array<i64: 1, 128>}, {transform_indices = @transform_3, window_bounds = array<i64: 1, 1, 256, 128>}]} {
    %c0 = arith.constant 0 : index
    %c0_0 = arith.constant 0 : index
    %c0_1 = arith.constant 0 : index
    %c0_2 = arith.constant 0 : index
    %c0_3 = arith.constant 0 : index
    %0 = vector.load %arg3[%c0, %c0_0, %c0_1, %c0_2, %c0_3] : memref<1x1x1x256x36xbf16, #tpu.memory_space<vmem>>, vector<1x1x1x256x36xbf16>
    %1 = vector.shape_cast %0 : vector<1x1x1x256x36xbf16> to vector<256x36xbf16>
    %c0_4 = arith.constant 0 : index
    %c0_5 = arith.constant 0 : index
    %c0_6 = arith.constant 0 : index
    %2 = vector.load %arg4[%c0_4, %c0_5, %c0_6] : memref<1x36x128xbf16, #tpu.memory_space<vmem>>, vector<1x36x128xbf16>
    %3 = vector.shape_cast %2 : vector<1x36x128xbf16> to vector<36x128xbf16>
    %cst = arith.constant dense<0.000000e+00> : vector<256x128xf32>
    %4 = tpu.matmul %1, %3, %cst {dimension_numbers = #tpu.dot_dimension_numbers<[1], [0], [0], [1], [0, 0, 1, 1], [], []>} : vector<256x36xbf16>, vector<36x128xbf16>, vector<256x128xf32> -> vector<256x128xf32>
    %c0_7 = arith.constant 0 : index
    %c0_8 = arith.constant 0 : index
    %5 = vector.load %arg5[%c0_7, %c0_8] : memref<1x128xf32, #tpu.memory_space<vmem>>, vector<1x128xf32>
    %6 = vector.broadcast %5 : vector<1x128xf32> to vector<256x128xf32>
    %7 = arith.addf %4, %6 : vector<256x128xf32>
    %cst_9 = arith.constant 0.000000e+00 : f32
    %8 = vector.broadcast %cst_9 : f32 to vector<256x128xf32>
    %9 = arith.maximumf %7, %8 : vector<256x128xf32>
    %10 = arith.truncf %9 : vector<256x128xf32> to vector<256x128xbf16>
    %c0_10 = arith.constant 0 : index
    %c0_11 = arith.constant 0 : index
    %c0_12 = arith.constant 0 : index
    %c0_13 = arith.constant 0 : index
    %11 = vector.load %arg6[%c0_10, %c0_11, %c0_12, %c0_13] : memref<1x1x256x128xbf16, #tpu.memory_space<vmem>>, vector<1x1x256x128xbf16>
    %12 = vector.shape_cast %11 : vector<1x1x256x128xbf16> to vector<256x128xbf16>
    %13 = vector.shape_cast %10 : vector<256x128xbf16> to vector<1x1x256x128xbf16>
    tpu.vector_store %arg6[%c0_10, %c0_11, %c0_12, %c0_13], %13 {strides = array<i32>} : memref<1x1x256x128xbf16, #tpu.memory_space<vmem>>, vector<1x1x256x128xbf16>,
    return
  }
  func.func @transform_0(%arg0: i32, %arg1: i32, %arg2: i32) -> (i32, i32, i32, i32, i32) {
    %c0_i32 = arith.constant 0 : i32
    %c0_i32_0 = arith.constant 0 : i32
    %c0_i32_1 = arith.constant 0 : i32
    %c0_i32_2 = arith.constant 0 : i32
    return %arg0, %arg1, %c0_i32, %c0_i32_0, %c0_i32_1 : i32, i32, i32, i32, i32
  }
  func.func @transform_1(%arg0: i32, %arg1: i32, %arg2: i32) -> (i32, i32, i32) {
    %c0_i32 = arith.constant 0 : i32
    %c0_i32_0 = arith.constant 0 : i32
    %c0_i32_1 = arith.constant 0 : i32
    return %c0_i32, %c0_i32_0, %arg2 : i32, i32, i32
  }
  func.func @transform_2(%arg0: i32, %arg1: i32, %arg2: i32) -> (i32, i32) {
    %c0_i32 = arith.constant 0 : i32
    %c0_i32_0 = arith.constant 0 : i32
    return %c0_i32, %arg2 : i32, i32
  }
  func.func @transform_3(%arg0: i32, %arg1: i32, %arg2: i32) -> (i32, i32, i32, i32) {
    %c0_i32 = arith.constant 0 : i32
    %c0_i32_0 = arith.constant 0 : i32
    return %arg0, %arg1, %c0_i32, %arg2 : i32, i32, i32, i32
  }
}

module attributes {stable_mosaic.version = 11 : i64} {
  func.func @_conv_bn_act_kernel(%arg0: i32, %arg1: i32, %arg2: i32, %arg3: memref<1x1x2x72x384xbf16, #tpu.memory_space<vmem>>, %arg4: memref<3x384x128xbf16, #tpu.memory_space<vmem>>, %arg5: memref<1x128xf32, #tpu.memory_space<vmem>>, %arg6: memref<1x1x64x128xbf16, #tpu.memory_space<vmem>>, %arg7: memref<1x1x64x128xbf16, #tpu.memory_space<vmem>>) attributes {dimension_semantics = [#tpu.dimension_semantics<parallel>, #tpu.dimension_semantics<parallel>, #tpu.dimension_semantics<parallel>], iteration_bounds = array<i64: 2, 1, 1>, scalar_prefetch = 0 : i64, scratch_operands = 0 : i64, tpu.core_type = #tpu.core_type<tc>, window_params = [{transform_indices = @transform_0, window_bounds = array<i64: 1, 1, 2, 72, 384>}, {transform_indices = @transform_1, window_bounds = array<i64: 3, 384, 128>}, {transform_indices = @transform_2, window_bounds = array<i64: 1, 128>}, {transform_indices = @transform_3, window_bounds = array<i64: 1, 1, 64, 128>}, {transform_indices = @transform_4, window_bounds = array<i64: 1, 1, 64, 128>}]} {
    %c0 = arith.constant 0 : index
    %c0_0 = arith.constant 0 : index
    %c0_1 = arith.constant 0 : index
    %c0_2 = arith.constant 0 : index
    %c0_3 = arith.constant 0 : index
    %0 = vector.load %arg3[%c0, %c0_0, %c0_1, %c0_2, %c0_3] : memref<1x1x2x72x384xbf16, #tpu.memory_space<vmem>>, vector<1x1x1x64x384xbf16>
    %1 = vector.shape_cast %0 : vector<1x1x1x64x384xbf16> to vector<64x384xbf16>
    %c0_4 = arith.constant 0 : index
    %c0_5 = arith.constant 0 : index
    %c0_6 = arith.constant 0 : index
    %2 = vector.load %arg4[%c0_4, %c0_5, %c0_6] : memref<3x384x128xbf16, #tpu.memory_space<vmem>>, vector<1x384x128xbf16>
    %3 = vector.shape_cast %2 : vector<1x384x128xbf16> to vector<384x128xbf16>
    %cst = arith.constant dense<0.000000e+00> : vector<64x128xf32>
    %4 = tpu.matmul %1, %3, %cst {dimension_numbers = #tpu.dot_dimension_numbers<[1], [0], [0], [1], [0, 0, 1, 1], [], []>} : vector<64x384xbf16>, vector<384x128xbf16>, vector<64x128xf32> -> vector<64x128xf32>
    %c0_7 = arith.constant 0 : index
    %c0_8 = arith.constant 0 : index
    %c1 = arith.constant 1 : index
    %c0_9 = arith.constant 0 : index
    %c0_10 = arith.constant 0 : index
    %5 = vector.load %arg3[%c0_7, %c0_8, %c1, %c0_9, %c0_10] : memref<1x1x2x72x384xbf16, #tpu.memory_space<vmem>>, vector<1x1x1x64x384xbf16>
    %6 = vector.shape_cast %5 : vector<1x1x1x64x384xbf16> to vector<64x384xbf16>
    %c1_11 = arith.constant 1 : index
    %c0_12 = arith.constant 0 : index
    %c0_13 = arith.constant 0 : index
    %7 = vector.load %arg4[%c1_11, %c0_12, %c0_13] : memref<3x384x128xbf16, #tpu.memory_space<vmem>>, vector<1x384x128xbf16>
    %8 = vector.shape_cast %7 : vector<1x384x128xbf16> to vector<384x128xbf16>
    %cst_14 = arith.constant dense<0.000000e+00> : vector<64x128xf32>
    %9 = tpu.matmul %6, %8, %cst_14 {dimension_numbers = #tpu.dot_dimension_numbers<[1], [0], [0], [1], [0, 0, 1, 1], [], []>} : vector<64x384xbf16>, vector<384x128xbf16>, vector<64x128xf32> -> vector<64x128xf32>
    %10 = arith.addf %4, %9 : vector<64x128xf32>
    %c0_15 = arith.constant 0 : index
    %c0_16 = arith.constant 0 : index
    %c0_17 = arith.constant 0 : index
    %c8 = arith.constant 8 : index
    %c0_18 = arith.constant 0 : index
    %11 = vector.load %arg3[%c0_15, %c0_16, %c0_17, %c8, %c0_18] : memref<1x1x2x72x384xbf16, #tpu.memory_space<vmem>>, vector<1x1x1x64x384xbf16>
    %12 = vector.shape_cast %11 : vector<1x1x1x64x384xbf16> to vector<64x384xbf16>
    %c2 = arith.constant 2 : index
    %c0_19 = arith.constant 0 : index
    %c0_20 = arith.constant 0 : index
    %13 = vector.load %arg4[%c2, %c0_19, %c0_20] : memref<3x384x128xbf16, #tpu.memory_space<vmem>>, vector<1x384x128xbf16>
    %14 = vector.shape_cast %13 : vector<1x384x128xbf16> to vector<384x128xbf16>
    %cst_21 = arith.constant dense<0.000000e+00> : vector<64x128xf32>
    %15 = tpu.matmul %12, %14, %cst_21 {dimension_numbers = #tpu.dot_dimension_numbers<[1], [0], [0], [1], [0, 0, 1, 1], [], []>} : vector<64x384xbf16>, vector<384x128xbf16>, vector<64x128xf32> -> vector<64x128xf32>
    %16 = arith.addf %10, %15 : vector<64x128xf32>
    %c0_22 = arith.constant 0 : index
    %c0_23 = arith.constant 0 : index
    %17 = vector.load %arg5[%c0_22, %c0_23] : memref<1x128xf32, #tpu.memory_space<vmem>>, vector<1x128xf32>
    %18 = vector.broadcast %17 : vector<1x128xf32> to vector<64x128xf32>
    %19 = arith.addf %16, %18 : vector<64x128xf32>
    %c0_24 = arith.constant 0 : index
    %c0_25 = arith.constant 0 : index
    %c0_26 = arith.constant 0 : index
    %c0_27 = arith.constant 0 : index
    %20 = vector.load %arg6[%c0_24, %c0_25, %c0_26, %c0_27] : memref<1x1x64x128xbf16, #tpu.memory_space<vmem>>, vector<1x1x64x128xbf16>
    %21 = vector.shape_cast %20 : vector<1x1x64x128xbf16> to vector<64x128xbf16>
    %22 = arith.extf %21 : vector<64x128xbf16> to vector<64x128xf32>
    %23 = arith.addf %19, %22 : vector<64x128xf32>
    %cst_28 = arith.constant 0.000000e+00 : f32
    %24 = vector.broadcast %cst_28 : f32 to vector<64x128xf32>
    %25 = arith.maximumf %23, %24 : vector<64x128xf32>
    %26 = arith.truncf %25 : vector<64x128xf32> to vector<64x128xbf16>
    %c0_29 = arith.constant 0 : index
    %c0_30 = arith.constant 0 : index
    %c0_31 = arith.constant 0 : index
    %c0_32 = arith.constant 0 : index
    %27 = vector.load %arg7[%c0_29, %c0_30, %c0_31, %c0_32] : memref<1x1x64x128xbf16, #tpu.memory_space<vmem>>, vector<1x1x64x128xbf16>
    %28 = vector.shape_cast %27 : vector<1x1x64x128xbf16> to vector<64x128xbf16>
    %29 = vector.shape_cast %26 : vector<64x128xbf16> to vector<1x1x64x128xbf16>
    tpu.vector_store %arg7[%c0_29, %c0_30, %c0_31, %c0_32], %29 {strides = array<i32>} : memref<1x1x64x128xbf16, #tpu.memory_space<vmem>>, vector<1x1x64x128xbf16>,
    return
  }
  func.func @transform_0(%arg0: i32, %arg1: i32, %arg2: i32) -> (i32, i32, i32, i32, i32) {
    %c0_i32 = arith.constant 0 : i32
    %c0_i32_0 = arith.constant 0 : i32
    %c0_i32_1 = arith.constant 0 : i32
    %c0_i32_2 = arith.constant 0 : i32
    return %arg0, %arg1, %c0_i32, %c0_i32_0, %c0_i32_1 : i32, i32, i32, i32, i32
  }
  func.func @transform_1(%arg0: i32, %arg1: i32, %arg2: i32) -> (i32, i32, i32) {
    %c0_i32 = arith.constant 0 : i32
    %c0_i32_0 = arith.constant 0 : i32
    %c0_i32_1 = arith.constant 0 : i32
    return %c0_i32, %c0_i32_0, %arg2 : i32, i32, i32
  }
  func.func @transform_2(%arg0: i32, %arg1: i32, %arg2: i32) -> (i32, i32) {
    %c0_i32 = arith.constant 0 : i32
    %c0_i32_0 = arith.constant 0 : i32
    return %c0_i32, %arg2 : i32, i32
  }
  func.func @transform_3(%arg0: i32, %arg1: i32, %arg2: i32) -> (i32, i32, i32, i32) {
    %c0_i32 = arith.constant 0 : i32
    %c0_i32_0 = arith.constant 0 : i32
    return %arg0, %arg1, %c0_i32, %arg2 : i32, i32, i32, i32
  }
  func.func @transform_4(%arg0: i32, %arg1: i32, %arg2: i32) -> (i32, i32, i32, i32) {
    %c0_i32 = arith.constant 0 : i32
    %c0_i32_0 = arith.constant 0 : i32
    return %arg0, %arg1, %c0_i32, %arg2 : i32, i32, i32, i32
  }
}

</mosaic_0001>

<llo_original>
// kernel: _lambda_.4
$region0: #{_lambda_.4}
  #allocation0 [shape = 'u32[]', space=smem, size = 0x4, offset = 0x4, fixed_abs, tag = 'smem constant byte address 0x4 - core index']
  #allocation1 [shape = 'u32[144,128]{1,0:T(1,128)}', space=vmem, size = 0x12000, scoped, tag = 'internal scratch']
  %s0 = inlined_call_operand.vmem [shape: bf16[2,1,1,64,4], index: 0, kind: input, shape index: {}]
  %s1 = inlined_call_operand.vmem [shape: bf16[1,4,128], index: 1, kind: input, shape index: {}]
  %s2 = inlined_call_operand.vmem [shape: f32[1,128], index: 2, kind: input, shape index: {}]
  %s3 = inlined_call_operand.vmem [shape: bf16[2,1,64,128], index: 3, kind: output, shape index: {}]
  %s4 = sld [smem:[#allocation0]]
  $region45: #{_lambda_.4} parent=0
    _
  %s6 = ssub.s32 1, %s4
  %s7 = scalar_select 0, %s6, %s4
  loop: start=0, step=1, limit=4
  $region2: #{_lambda_.4} parent=0 // loop_pre_header
    _
  $region3: #{_lambda_.4} parent=0 // loop_header
    %s9 = sphi 0, %s13
    %p10 = scmp.ge.s32.totalorder %s9, 4
    %s16 = sphi 0, %s35
    %s17 = sphi 0, %s31
    %s18 = sphi 0, %s27
    %s19 = sphi 0, %s16
    %s20 = sphi 0, %s17
    %s21 = sphi 0, %s18
    %s22 = sphi 0, %s19
    %s23 = sphi 0, %s20
    %s24 = sphi 0, %s21
    %s40 = sphi 0, %s42
    %s43 = sphi 0, %s40
    %s44 = sphi 0, %s43
    %s60 = sphi 0, %s44
    %s66 = sphi 0, %s68
    %s69 = sphi 0, %s66
    %s70 = sphi 0, %s69
    %s86 = sphi 0, %s70
    %s92 = sphi 0, %s94
    %s95 = sphi 0, %s92
    %s96 = sphi 0, %s95
    %s112 = sphi 0, %s96
    %s122 = sphi 0, %s124
    %s125 = sphi 0, %s122
    %s126 = sphi 0, %s125
    %s142 = sphi 0, %s126
  $region4: #{_lambda_.4} parent=0 // loop_header_branch
    %12 = sbr.rel (%p10) target = $region8
  $region5: #{_lambda_.4} parent=0 // loop_body
    %s14 = ssub.s32 %s9, 1
    %s15 = ssub.s32 %s9, 2
    %s25 = sadd.s32 1, %s18
    %p26 = scmp.ge.s32.totalorder %s25, 1
    %s27 = scalar_select %p26, 0, %s25
    %s28 = sadd.s32 1, %s17
    %s29 = scalar_select %p26, %s28, %s17
    %p30 = scmp.ge.s32.totalorder %s29, 1
    %s31 = scalar_select %p30, 0, %s29
    %s32 = sadd.s32 1, %s16
    %s33 = scalar_select %p30, %s32, %s16
    %p34 = scmp.ge.s32.totalorder %s33, 2
    %s35 = scalar_select %p34, 0, %s33
    %s36 = ssub.s32 %s16, %s35
    %s37 = ssub.s32 %s17, %s31
    %s38 = sor.u32 %s36, %s37
    %p39 = scmp.eq.s32.totalorder %s38, 0
    %s41 = sadd.s32 %s40, 1
    %s42 = scalar_select %p39, %s40, %s41
    %p45 = pneg %p39
    %p46 = scmp.eq.s32.totalorder %s9, 1
    %p47 = por %p45, %p46
    %p48 = scmp.ne.s32.totalorder %s40, %s43
    %p49 = scmp.eq.s32.totalorder %s9, 0
    %p50 = por %p48, %p49
    %p51 = scmp.ne.s32.totalorder %s40, %s43
    %p52 = scmp.eq.s32.totalorder %s14, 1
    %p53 = por %p51, %p52
    %p54 = scmp.ne.s32.totalorder %s43, %s44
    %p55 = scmp.eq.s32.totalorder %s14, 0
    %p56 = por %p54, %p55
    %p57 = scmp.ne.s32.totalorder %s43, %s44
    %p58 = scmp.eq.s32.totalorder %s15, 1
    %p59 = por %p57, %p58
    %p61 = scmp.ne.s32.totalorder %s44, %s60
    %p62 = scmp.eq.s32.totalorder %s15, 0
    %p63 = por %p61, %p62
    %s64 = ssub.s32 %s18, %s27
    %p65 = scmp.eq.s32.totalorder %s64, 0
    %s67 = sadd.s32 %s66, 1
    %s68 = scalar_select %p65, %s66, %s67
    %p71 = pneg %p65
    %p72 = scmp.eq.s32.totalorder %s9, 1
    %p73 = por %p71, %p72
    %p74 = scmp.ne.s32.totalorder %s66, %s69
    %p75 = scmp.eq.s32.totalorder %s9, 0
    %p76 = por %p74, %p75
    %p77 = scmp.ne.s32.totalorder %s66, %s69
    %p78 = scmp.eq.s32.totalorder %s14, 1
    %p79 = por %p77, %p78
    %p80 = scmp.ne.s32.totalorder %s69, %s70
    %p81 = scmp.eq.s32.totalorder %s14, 0
    %p82 = por %p80, %p81
    %p83 = scmp.ne.s32.totalorder %s69, %s70
    %p84 = scmp.eq.s32.totalorder %s15, 1
    %p85 = por %p83, %p84
    %p87 = scmp.ne.s32.totalorder %s70, %s86
    %p88 = scmp.eq.s32.totalorder %s15, 0
    %p89 = por %p87, %p88
    %s90 = ssub.s32 %s18, %s27
    %p91 = scmp.eq.s32.totalorder %s90, 0
    %s93 = sadd.s32 %s92, 1
    %s94 = scalar_select %p91, %s92, %s93
    %p97 = pneg %p91
    %p98 = scmp.eq.s32.totalorder %s9, 1
    %p99 = por %p97, %p98
    %p100 = scmp.ne.s32.totalorder %s92, %s95
    %p101 = scmp.eq.s32.totalorder %s9, 0
    %p102 = por %p100, %p101
    %p103 = scmp.ne.s32.totalorder %s92, %s95
    %p104 = scmp.eq.s32.totalorder %s14, 1
    %p105 = por %p103, %p104
    %p106 = scmp.ne.s32.totalorder %s95, %s96
    %p107 = scmp.eq.s32.totalorder %s14, 0
    %p108 = por %p106, %p107
    %p109 = scmp.ne.s32.totalorder %s95, %s96
    %p110 = scmp.eq.s32.totalorder %s15, 1
    %p111 = por %p109, %p110
    %p113 = scmp.ne.s32.totalorder %s96, %s112
    %p114 = scmp.eq.s32.totalorder %s15, 0
    %p115 = por %p113, %p114
    %s116 = ssub.s32 %s16, %s35
    %s117 = ssub.s32 %s17, %s31
    %s118 = sor.u32 %s116, %s117
    %s119 = ssub.s32 %s18, %s27
    %s120 = sor.u32 %s118, %s119
    %p121 = scmp.eq.s32.totalorder %s120, 0
    %s123 = sadd.s32 %s122, 1
    %s124 = scalar_select %p121, %s122, %s123
    %p127 = pneg %p121
    %p128 = scmp.eq.s32.totalorder %s9, 1
    %p129 = por %p127, %p128
    %p130 = scmp.ne.s32.totalorder %s122, %s125
    %p131 = scmp.eq.s32.totalorder %s9, 0
    %p132 = por %p130, %p131
    %p133 = scmp.ne.s32.totalorder %s122, %s125
    %p134 = scmp.eq.s32.totalorder %s14, 1
    %p135 = por %p133, %p134
    %p136 = scmp.ne.s32.totalorder %s125, %s126
    %p137 = scmp.eq.s32.totalorder %s14, 0
    %p138 = por %p136, %p137
    %p139 = scmp.ne.s32.totalorder %s125, %s126
    %p140 = scmp.eq.s32.totalorder %s15, 1
    %p141 = por %p139, %p140
    %p143 = scmp.ne.s32.totalorder %s126, %s142
    %p144 = scmp.eq.s32.totalorder %s15, 0
    %p145 = por %p143, %p144
    %p146 = scmp.le.s32.totalorder 1, %s9
    %p147 = scmp.lt.s32.totalorder %s9, 3
    %p148 = pnand %p146, %p147
    %p149 = pneg %p148
    // Predicated region
    $region9: #{_lambda_.4} parent=5 // pred_check
      _
    $region10: #{_lambda_.4} parent=5 // pred_check_branch
      %151 = sbr.rel (%p148) target = $region12
    $region11: #{_lambda_.4} parent=5 // pred_region
      %s152 = ssub.s32 %s9, 1
      // Predicated region
      $region13: #{_lambda_.4} parent=11 // pred_check
        %p153 = pneg %p82
      $region14: #{_lambda_.4} parent=11 // pred_check_branch
        %155 = sbr.rel (%p153) target = $region16
      $region15: #{_lambda_.4} parent=11 // pred_region
        %p156 = scmp.lt.s32.totalorder %s21, 0
        %s157 = scalar_select %p156, %s21, 0
        %s158 = smul.addr %s157, 2
        %s159 = scalar_lea.vmem %s1, %s158
      $region16: #{_lambda_.4} parent=11 // pred_fallthru
        _
      // Predicated region
      $region17: #{_lambda_.4} parent=11 // pred_check
        %p160 = pneg %p108
      $region18: #{_lambda_.4} parent=11 // pred_check_branch
        %162 = sbr.rel (%p160) target = $region20
      $region19: #{_lambda_.4} parent=11 // pred_region
        %p163 = scmp.lt.s32.totalorder %s21, 0
        %s164 = scalar_select %p163, %s21, 0
        %s165 = scalar_lea.vmem %s2, %s164
      $region20: #{_lambda_.4} parent=11 // pred_fallthru
        _
    $region12: #{_lambda_.4} parent=5 // pred_fallthru
      _
    %p166 = scmp.lt.s32.totalorder %s9, 2
    // Predicated region
    $region21: #{_lambda_.4} parent=5 // pred_check
      %p167 = pneg %p166
    $region22: #{_lambda_.4} parent=5 // pred_check_branch
      %169 = sbr.rel (%p167) target = $region24
    $region23: #{_lambda_.4} parent=5 // pred_region
      // Predicated region
      $region25: #{_lambda_.4} parent=23 // pred_check
        %p170 = pneg %p50
      $region26: #{_lambda_.4} parent=23 // pred_check_branch
        %172 = sbr.rel (%p170) target = $region28
      $region27: #{_lambda_.4} parent=23 // pred_region
        %p173 = scmp.lt.s32.totalorder %s16, 1
        %s174 = scalar_select %p173, %s16, 1
        %p175 = scmp.lt.s32.totalorder %s17, 0
        %s176 = scalar_select %p175, %s17, 0
        %s177 = smul.addr %s176, 8
        %s178 = smul.addr %s174, 8
        %s179 = sadd.s32 %s177, %s178
        %s180 = smul.addr %s179, 4
        %s181 = scalar_lea.vmem %s0, %s180
      $region28: #{_lambda_.4} parent=23 // pred_fallthru
        _
    $region24: #{_lambda_.4} parent=5 // pred_fallthru
      _
    %p182 = scmp.le.s32.totalorder 1, %s9
    %p183 = scmp.lt.s32.totalorder %s9, 3
    %p184 = pnand %p182, %p183
    %p185 = pneg %p184
    // Predicated region
    $region29: #{_lambda_.4} parent=5 // pred_check
      _
    $region30: #{_lambda_.4} parent=5 // pred_check_branch
      %187 = sbr.rel (%p184) target = $region32
    $region31: #{_lambda_.4} parent=5 // pred_region
      %s188 = ssub.s32 %s9, 1
      %p189 = scmp.lt.s32.totalorder %s19, 1
      %s190 = scalar_select %p189, %s19, 1
      %p191 = scmp.lt.s32.totalorder %s20, 0
      %s192 = scalar_select %p191, %s20, 0
      %s193 = smul.addr %s192, 8
      %s194 = smul.addr %s190, 8
      %s195 = sadd.s32 %s193, %s194
      %s196 = smul.addr %s195, 4
      %s197 = scalar_lea.vmem %s0, %s196
      %p198 = pneg %p56
      %p199 = pneg %p53
      %p200 = scmp.lt.s32.totalorder %s21, 0
      %s201 = scalar_select %p200, %s21, 0
      %s202 = smul.addr %s201, 2
      %s203 = scalar_lea.vmem %s1, %s202
      %p204 = pneg %p82
      %p205 = pneg %p79
      %p206 = scmp.lt.s32.totalorder %s21, 0
      %s207 = scalar_select %p206, %s21, 0
      %s208 = scalar_lea.vmem %s2, %s207
      %p209 = pneg %p108
      %p210 = pneg %p105
      %p211 = pneg %p138
      %p212 = pneg %p135
      %p213 = scmp.lt.s32.totalorder %s19, 1
      %s214 = scalar_select %p213, %s19, 1
      %p215 = scmp.lt.s32.totalorder %s20, 0
      %s216 = scalar_select %p215, %s20, 0
      %p217 = scmp.lt.s32.totalorder %s21, 0
      %s218 = scalar_select %p217, %s21, 0
      %s219 = smul.addr %s216, 8
      %s220 = sadd.s32 %s218, %s219
      %s221 = smul.addr %s214, 8
      %s222 = sadd.s32 %s220, %s221
      %s223 = smul.addr %s222, 4
      %s224 = scalar_lea.vmem %s3, %s223
      %p225 = scmp.lt.s32.totalorder %s19, 1
      %s226 = scalar_select %p225, %s19, 1
      %p227 = scmp.lt.s32.totalorder %s20, 0
      %s228 = scalar_select %p227, %s20, 0
      %s229 = smul.addr %s228, 8
      %s230 = smul.addr %s226, 8
      %s231 = sadd.s32 %s229, %s230
      %s232 = smul.addr %s231, 4
      %s233 = scalar_lea.vmem %s0, %s232
      %p234 = scmp.lt.s32.totalorder %s21, 0
      %s235 = scalar_select %p234, %s21, 0
      %s236 = smul.addr %s235, 2
      %s237 = scalar_lea.vmem %s1, %s236
      %p238 = scmp.lt.s32.totalorder %s21, 0
      %s239 = scalar_select %p238, %s21, 0
      %s240 = scalar_lea.vmem %s2, %s239
      %p241 = scmp.lt.s32.totalorder %s19, 1
      %s242 = scalar_select %p241, %s19, 1
      %p243 = scmp.lt.s32.totalorder %s20, 0
      %s244 = scalar_select %p243, %s20, 0
      %p245 = scmp.lt.s32.totalorder %s21, 0
      %s246 = scalar_select %p245, %s21, 0
      %s247 = smul.addr %s244, 8
      %s248 = sadd.s32 %s246, %s247
      %s249 = smul.addr %s242, 8
      %s250 = sadd.s32 %s248, %s249
      %s251 = smul.addr %s250, 4
      %s252 = scalar_lea.vmem %s3, %s251
      %v254 = vld [vmem:[%s233] sm:$0xf]
      %v255 = vld [vmem:[%s233 + $0x4] sm:$0xf]
      %v256 = vld [vmem:[%s233 + $0x8] sm:$0xf]
      %v257 = vld [vmem:[%s233 + $0xc] sm:$0xf]
      %v258 = vld [vmem:[%s233 + $0x10] sm:$0xf]
      %v259 = vld [vmem:[%s233 + $0x14] sm:$0xf]
      %v260 = vld [vmem:[%s233 + $0x18] sm:$0xf]
      %v261 = vld [vmem:[%s233 + $0x1c] sm:$0xf]
      %v262 = vld [vmem:[%s237] sm:$0x3]
      %v263 = vld [vmem:[%s240] sm:$0x1]
      %v265 = vlaneseq
      %v266 = vshrl.u32 %v265, 7
      %v267 = vsub.s32 0, %v266
      %v268 = vrot.slane %v263, %v267
      %v278 = vunpack.c.l.b16 %v254
      %v279 = vunpack.c.l.b16 %v255
      %v280 = vunpack.c.l.b16 %v256
      %v281 = vunpack.c.l.b16 %v257
      %v282 = vunpack.c.l.b16 %v258
      %v283 = vunpack.c.l.b16 %v259
      %v284 = vunpack.c.l.b16 %v260
      %v285 = vunpack.c.l.b16 %v261
      %v286 = vpack.c.b16 %v279, %v278
      %v287 = vpack.c.b16 %v281, %v280
      %v288 = vpack.c.b16 %v283, %v282
      %v289 = vpack.c.b16 %v285, %v284
      %vm290 = vcmask 31744
      %v292 = vsel %vm290, %v286, 0
      %v295 = vsel %vm290, %v287, 0
      %v298 = vsel %vm290, %v288, 0
      %v301 = vsel %vm290, %v289, 0
      %vm303 = vcmask 1041408
      %v305 = vsel %vm303, %v262, 0
      %307 = vmatprep.subr.bf16.mxu0 0
      %308 = vmatpush1.bf16.msra.mxu0 0
      %309 = vmatprep.subr.bf16.mxu0 0
      %310 = vmatpush1.bf16.msra.mxu0 0
      %311 = vmatprep.subr.bf16.mxu0 0
      %312 = vmatpush1.bf16.msra.mxu0 0
      %313 = vmatprep.subr.bf16.mxu0 0
      %314 = vmatpush1.bf16.msra.mxu0 0
      %315 = vmatprep.subr.bf16.mxu0 0
      %316 = vmatpush1.bf16.msra.mxu0 0
      %317 = vmatprep.subr.bf16.mxu0 0
      %318 = vmatpush1.bf16.msra.mxu0 0
      %319 = vmatprep.subr.bf16.mxu0 0
      %320 = vmatpush1.bf16.msra.mxu0 0
      %321 = vmatprep.subr.bf16.mxu0 0
      %322 = vmatpush1.bf16.msra.mxu0 %v305
      %323 = vmatprep.subr.bf16.mxu0 0
      %324 = vmatpush2.bf16.msra.mxu0 0
      %325 = vmatprep.subr.bf16.mxu0 0
      %326 = vmatpush2.bf16.msra.mxu0 0
      %327 = vmatprep.subr.bf16.mxu0 0
      %328 = vmatpush2.bf16.msra.mxu0 0
      %329 = vmatprep.subr.bf16.mxu0 0
      %330 = vmatpush2.bf16.msra.mxu0 0
      %331 = vmatprep.subr.bf16.mxu0 0
      %332 = vmatpush2.bf16.msra.mxu0 0
      %333 = vmatprep.subr.bf16.mxu0 0
      %334 = vmatpush2.bf16.msra.mxu0 0
      %335 = vmatprep.subr.bf16.mxu0 0
      %336 = vmatpush2.bf16.msra.mxu0 0
      %337 = vmatprep.subr.bf16.mxu0 0
      %338 = vmatpush2.bf16.msra.mxu0 0
      %339 = vmatprep.mubr.bf16.mxu0 0
      %340 = vmatmul.mubr.bf16.gmra.mxu0 %v292
      %v341 = vpop.f32.mrf.mxu0
      %v342 = vadd.f32 %v268, %v341
      %v343 = vpop.f32.mrf.mxu0
      %v344 = vpop.f32.mrf.mxu0
      %v345 = vadd.f32 %v268, %v344
      %v346 = vpop.f32.mrf.mxu0
      %347 = vmatprep.mubr.bf16.mxu0 0
      %348 = vmatmul.mubr.bf16.gmra.mxu0 %v295
      %v349 = vpop.f32.mrf.mxu0
      %v350 = vadd.f32 %v268, %v349
      %v351 = vpop.f32.mrf.mxu0
      %v352 = vpop.f32.mrf.mxu0
      %v353 = vadd.f32 %v268, %v352
      %v354 = vpop.f32.mrf.mxu0
      %355 = vmatprep.mubr.bf16.mxu0 0
      %356 = vmatmul.mubr.bf16.gmra.mxu0 %v298
      %v357 = vpop.f32.mrf.mxu0
      %v358 = vadd.f32 %v268, %v357
      %v359 = vpop.f32.mrf.mxu0
      %v360 = vpop.f32.mrf.mxu0
      %v361 = vadd.f32 %v268, %v360
      %v362 = vpop.f32.mrf.mxu0
      %363 = vmatprep.mubr.bf16.mxu0 0
      %364 = vmatmul.mubr.bf16.gmra.mxu0 %v301
      %v365 = vpop.f32.mrf.mxu0
      %v366 = vadd.f32 %v268, %v365
      %v367 = vpop.f32.mrf.mxu0
      %v368 = vpop.f32.mrf.mxu0
      %v369 = vadd.f32 %v268, %v368
      %v370 = vpop.f32.mrf.mxu0
      %371 = vdwg.mxu0
      %v372 = vpack.c.bf16 %v345, %v342
      %v373 = vpack.c.bf16 %v353, %v350
      %v374 = vpack.c.bf16 %v361, %v358
      %v375 = vpack.c.bf16 %v369, %v366
      %v380 = vunpack.c.l.b16 %v372
      %v381 = vunpack.c.h.b16 %v372
      %v382 = vunpack.c.l.b16 %v373
      %v383 = vunpack.c.h.b16 %v373
      %v384 = vunpack.c.l.b16 %v374
      %v385 = vunpack.c.h.b16 %v374
      %v386 = vunpack.c.l.b16 %v375
      %v387 = vunpack.c.h.b16 %v375
      %v388 = vpack.c.b16 %v380, %v380
      %v389 = vpack.c.b16 %v381, %v381
      %v390 = vpack.c.b16 %v382, %v382
      %v391 = vpack.c.b16 %v383, %v383
      %v392 = vpack.c.b16 %v384, %v384
      %v393 = vpack.c.b16 %v385, %v385
      %v394 = vpack.c.b16 %v386, %v386
      %v395 = vpack.c.b16 %v387, %v387
      %404 = vst [vmem:[%s252] sm:$0xf] %v388
      %405 = vst [vmem:[%s252 + $0x4] sm:$0xf] %v389
      %406 = vst [vmem:[%s252 + $0x8] sm:$0xf] %v390
      %407 = vst [vmem:[%s252 + $0xc] sm:$0xf] %v391
      %408 = vst [vmem:[%s252 + $0x10] sm:$0xf] %v392
      %409 = vst [vmem:[%s252 + $0x14] sm:$0xf] %v393
      %410 = vst [vmem:[%s252 + $0x18] sm:$0xf] %v394
      %411 = vst [vmem:[%s252 + $0x1c] sm:$0xf] %v395
      %p412 = scmp.lt.s32.totalorder %s19, 1
      %s413 = scalar_select %p412, %s19, 1
      %p414 = scmp.lt.s32.totalorder %s20, 0
      %s415 = scalar_select %p414, %s20, 0
      %p416 = scmp.lt.s32.totalorder %s21, 0
      %s417 = scalar_select %p416, %s21, 0
      %s418 = smul.addr %s415, 8
      %s419 = sadd.s32 %s417, %s418
      %s420 = smul.addr %s413, 8
      %s421 = sadd.s32 %s419, %s420
      %s422 = smul.addr %s421, 4
      %s423 = scalar_lea.vmem %s3, %s422
      // Predicated region
      $region33: #{_lambda_.4} parent=31 // pred_check
        %p424 = pneg %p135
      $region34: #{_lambda_.4} parent=31 // pred_check_branch
        %426 = sbr.rel (%p424) target = $region36
      $region35: #{_lambda_.4} parent=31 // pred_region
        _
      $region36: #{_lambda_.4} parent=31 // pred_fallthru
        _
    $region32: #{_lambda_.4} parent=5 // pred_fallthru
      _
    %p427 = scmp.le.s32.totalorder 2, %s9
    // Predicated region
    $region37: #{_lambda_.4} parent=5 // pred_check
      %p428 = pneg %p427
    $region38: #{_lambda_.4} parent=5 // pred_check_branch
      %430 = sbr.rel (%p428) target = $region40
    $region39: #{_lambda_.4} parent=5 // pred_region
      %s431 = ssub.s32 %s9, 2
      // Predicated region
      $region41: #{_lambda_.4} parent=39 // pred_check
        %p432 = pneg %p141
      $region42: #{_lambda_.4} parent=39 // pred_check_branch
        %434 = sbr.rel (%p432) target = $region44
      $region43: #{_lambda_.4} parent=39 // pred_region
        %p435 = scmp.lt.s32.totalorder %s22, 1
        %s436 = scalar_select %p435, %s22, 1
        %p437 = scmp.lt.s32.totalorder %s23, 0
        %s438 = scalar_select %p437, %s23, 0
        %p439 = scmp.lt.s32.totalorder %s24, 0
        %s440 = scalar_select %p439, %s24, 0
        %s441 = smul.addr %s438, 8
        %s442 = sadd.s32 %s440, %s441
        %s443 = smul.addr %s436, 8
        %s444 = sadd.s32 %s442, %s443
        %s445 = smul.addr %s444, 4
        %s446 = scalar_lea.vmem %s3, %s445
      $region44: #{_lambda_.4} parent=39 // pred_fallthru
        _
    $region40: #{_lambda_.4} parent=5 // pred_fallthru
      _
  $region6: #{_lambda_.4} parent=0 // loop_footer
    %s13 = sadd.s32 1, %s9
  $region7: #{_lambda_.4} parent=0 // loop_footer_branch
    %8 = sbr.rel target = $region3
  $region8: #{_lambda_.4} parent=0 // loop_exit
    _

// kernel: _lambda_.3
$region0: #{_lambda_.3}
  #allocation0 [shape = 'u32[]', space=smem, size = 0x4, offset = 0x4, fixed_abs, tag = 'smem constant byte address 0x4 - core index']
  #allocation1 [shape = 'u32[144,128]{1,0:T(1,128)}', space=vmem, size = 0x12000, scoped, tag = 'internal scratch']
  %s0 = inlined_call_operand.vmem [shape: bf16[2,1,1,256,36], index: 0, kind: input, shape index: {}]
  %s1 = inlined_call_operand.vmem [shape: bf16[1,36,128], index: 1, kind: input, shape index: {}]
  %s2 = inlined_call_operand.vmem [shape: f32[1,128], index: 2, kind: input, shape index: {}]
  %s3 = inlined_call_operand.vmem [shape: bf16[2,1,256,128], index: 3, kind: output, shape index: {}]
  %s4 = sld [smem:[#allocation0]]
  $region45: #{_lambda_.3} parent=0
    _
  %s6 = ssub.s32 1, %s4
  %s7 = scalar_select 0, %s6, %s4
  loop: start=0, step=1, limit=4
  $region2: #{_lambda_.3} parent=0 // loop_pre_header
    _
  $region3: #{_lambda_.3} parent=0 // loop_header
    %s9 = sphi 0, %s13
    %p10 = scmp.ge.s32.totalorder %s9, 4
    %s16 = sphi 0, %s35
    %s17 = sphi 0, %s31
    %s18 = sphi 0, %s27
    %s19 = sphi 0, %s16
    %s20 = sphi 0, %s17
    %s21 = sphi 0, %s18
    %s22 = sphi 0, %s19
    %s23 = sphi 0, %s20
    %s24 = sphi 0, %s21
    %s40 = sphi 0, %s42
    %s43 = sphi 0, %s40
    %s44 = sphi 0, %s43
    %s60 = sphi 0, %s44
    %s66 = sphi 0, %s68
    %s69 = sphi 0, %s66
    %s70 = sphi 0, %s69
    %s86 = sphi 0, %s70
    %s92 = sphi 0, %s94
    %s95 = sphi 0, %s92
    %s96 = sphi 0, %s95
    %s112 = sphi 0, %s96
    %s122 = sphi 0, %s124
    %s125 = sphi 0, %s122
    %s126 = sphi 0, %s125
    %s142 = sphi 0, %s126
  $region4: #{_lambda_.3} parent=0 // loop_header_branch
    %12 = sbr.rel (%p10) target = $region8
  $region5: #{_lambda_.3} parent=0 // loop_body
    %s14 = ssub.s32 %s9, 1
    %s15 = ssub.s32 %s9, 2
    %s25 = sadd.s32 1, %s18
    %p26 = scmp.ge.s32.totalorder %s25, 1
    %s27 = scalar_select %p26, 0, %s25
    %s28 = sadd.s32 1, %s17
    %s29 = scalar_select %p26, %s28, %s17
    %p30 = scmp.ge.s32.totalorder %s29, 1
    %s31 = scalar_select %p30, 0, %s29
    %s32 = sadd.s32 1, %s16
    %s33 = scalar_select %p30, %s32, %s16
    %p34 = scmp.ge.s32.totalorder %s33, 2
    %s35 = scalar_select %p34, 0, %s33
    %s36 = ssub.s32 %s16, %s35
    %s37 = ssub.s32 %s17, %s31
    %s38 = sor.u32 %s36, %s37
    %p39 = scmp.eq.s32.totalorder %s38, 0
    %s41 = sadd.s32 %s40, 1
    %s42 = scalar_select %p39, %s40, %s41
    %p45 = pneg %p39
    %p46 = scmp.eq.s32.totalorder %s9, 1
    %p47 = por %p45, %p46
    %p48 = scmp.ne.s32.totalorder %s40, %s43
    %p49 = scmp.eq.s32.totalorder %s9, 0
    %p50 = por %p48, %p49
    %p51 = scmp.ne.s32.totalorder %s40, %s43
    %p52 = scmp.eq.s32.totalorder %s14, 1
    %p53 = por %p51, %p52
    %p54 = scmp.ne.s32.totalorder %s43, %s44
    %p55 = scmp.eq.s32.totalorder %s14, 0
    %p56 = por %p54, %p55
    %p57 = scmp.ne.s32.totalorder %s43, %s44
    %p58 = scmp.eq.s32.totalorder %s15, 1
    %p59 = por %p57, %p58
    %p61 = scmp.ne.s32.totalorder %s44, %s60
    %p62 = scmp.eq.s32.totalorder %s15, 0
    %p63 = por %p61, %p62
    %s64 = ssub.s32 %s18, %s27
    %p65 = scmp.eq.s32.totalorder %s64, 0
    %s67 = sadd.s32 %s66, 1
    %s68 = scalar_select %p65, %s66, %s67
    %p71 = pneg %p65
    %p72 = scmp.eq.s32.totalorder %s9, 1
    %p73 = por %p71, %p72
    %p74 = scmp.ne.s32.totalorder %s66, %s69
    %p75 = scmp.eq.s32.totalorder %s9, 0
    %p76 = por %p74, %p75
    %p77 = scmp.ne.s32.totalorder %s66, %s69
    %p78 = scmp.eq.s32.totalorder %s14, 1
    %p79 = por %p77, %p78
    %p80 = scmp.ne.s32.totalorder %s69, %s70
    %p81 = scmp.eq.s32.totalorder %s14, 0
    %p82 = por %p80, %p81
    %p83 = scmp.ne.s32.totalorder %s69, %s70
    %p84 = scmp.eq.s32.totalorder %s15, 1
    %p85 = por %p83, %p84
    %p87 = scmp.ne.s32.totalorder %s70, %s86
    %p88 = scmp.eq.s32.totalorder %s15, 0
    %p89 = por %p87, %p88
    %s90 = ssub.s32 %s18, %s27
    %p91 = scmp.eq.s32.totalorder %s90, 0
    %s93 = sadd.s32 %s92, 1
    %s94 = scalar_select %p91, %s92, %s93
    %p97 = pneg %p91
    %p98 = scmp.eq.s32.totalorder %s9, 1
    %p99 = por %p97, %p98
    %p100 = scmp.ne.s32.totalorder %s92, %s95
    %p101 = scmp.eq.s32.totalorder %s9, 0
    %p102 = por %p100, %p101
    %p103 = scmp.ne.s32.totalorder %s92, %s95
    %p104 = scmp.eq.s32.totalorder %s14, 1
    %p105 = por %p103, %p104
    %p106 = scmp.ne.s32.totalorder %s95, %s96
    %p107 = scmp.eq.s32.totalorder %s14, 0
    %p108 = por %p106, %p107
    %p109 = scmp.ne.s32.totalorder %s95, %s96
    %p110 = scmp.eq.s32.totalorder %s15, 1
    %p111 = por %p109, %p110
    %p113 = scmp.ne.s32.totalorder %s96, %s112
    %p114 = scmp.eq.s32.totalorder %s15, 0
    %p115 = por %p113, %p114
    %s116 = ssub.s32 %s16, %s35
    %s117 = ssub.s32 %s17, %s31
    %s118 = sor.u32 %s116, %s117
    %s119 = ssub.s32 %s18, %s27
    %s120 = sor.u32 %s118, %s119
    %p121 = scmp.eq.s32.totalorder %s120, 0
    %s123 = sadd.s32 %s122, 1
    %s124 = scalar_select %p121, %s122, %s123
    %p127 = pneg %p121
    %p128 = scmp.eq.s32.totalorder %s9, 1
    %p129 = por %p127, %p128
    %p130 = scmp.ne.s32.totalorder %s122, %s125
    %p131 = scmp.eq.s32.totalorder %s9, 0
    %p132 = por %p130, %p131
    %p133 = scmp.ne.s32.totalorder %s122, %s125
    %p134 = scmp.eq.s32.totalorder %s14, 1
    %p135 = por %p133, %p134
    %p136 = scmp.ne.s32.totalorder %s125, %s126
    %p137 = scmp.eq.s32.totalorder %s14, 0
    %p138 = por %p136, %p137
    %p139 = scmp.ne.s32.totalorder %s125, %s126
    %p140 = scmp.eq.s32.totalorder %s15, 1
    %p141 = por %p139, %p140
    %p143 = scmp.ne.s32.totalorder %s126, %s142
    %p144 = scmp.eq.s32.totalorder %s15, 0
    %p145 = por %p143, %p144
    %p146 = scmp.le.s32.totalorder 1, %s9
    %p147 = scmp.lt.s32.totalorder %s9, 3
    %p148 = pnand %p146, %p147
    %p149 = pneg %p148
    // Predicated region
    $region9: #{_lambda_.3} parent=5 // pred_check
      _
    $region10: #{_lambda_.3} parent=5 // pred_check_branch
      %151 = sbr.rel (%p148) target = $region12
    $region11: #{_lambda_.3} parent=5 // pred_region
      %s152 = ssub.s32 %s9, 1
      // Predicated region
      $region13: #{_lambda_.3} parent=11 // pred_check
        %p153 = pneg %p82
      $region14: #{_lambda_.3} parent=11 // pred_check_branch
        %155 = sbr.rel (%p153) target = $region16
      $region15: #{_lambda_.3} parent=11 // pred_region
        %p156 = scmp.lt.s32.totalorder %s21, 0
        %s157 = scalar_select %p156, %s21, 0
        %s158 = smul.addr %s157, 4
        %s159 = scalar_lea.vmem %s1, %s158
      $region16: #{_lambda_.3} parent=11 // pred_fallthru
        _
      // Predicated region
      $region17: #{_lambda_.3} parent=11 // pred_check
        %p160 = pneg %p108
      $region18: #{_lambda_.3} parent=11 // pred_check_branch
        %162 = sbr.rel (%p160) target = $region20
      $region19: #{_lambda_.3} parent=11 // pred_region
        %p163 = scmp.lt.s32.totalorder %s21, 0
        %s164 = scalar_select %p163, %s21, 0
        %s165 = scalar_lea.vmem %s2, %s164
      $region20: #{_lambda_.3} parent=11 // pred_fallthru
        _
    $region12: #{_lambda_.3} parent=5 // pred_fallthru
      _
    %p166 = scmp.lt.s32.totalorder %s9, 2
    // Predicated region
    $region21: #{_lambda_.3} parent=5 // pred_check
      %p167 = pneg %p166
    $region22: #{_lambda_.3} parent=5 // pred_check_branch
      %169 = sbr.rel (%p167) target = $region24
    $region23: #{_lambda_.3} parent=5 // pred_region
      // Predicated region
      $region25: #{_lambda_.3} parent=23 // pred_check
        %p170 = pneg %p50
      $region26: #{_lambda_.3} parent=23 // pred_check_branch
        %172 = sbr.rel (%p170) target = $region28
      $region27: #{_lambda_.3} parent=23 // pred_region
        %p173 = scmp.lt.s32.totalorder %s16, 1
        %s174 = scalar_select %p173, %s16, 1
        %p175 = scmp.lt.s32.totalorder %s17, 0
        %s176 = scalar_select %p175, %s17, 0
        %s177 = smul.addr %s176, 32
        %s178 = smul.addr %s174, 32
        %s179 = sadd.s32 %s177, %s178
        %s180 = smul.addr %s179, 4
        %s181 = scalar_lea.vmem %s0, %s180
      $region28: #{_lambda_.3} parent=23 // pred_fallthru
        _
    $region24: #{_lambda_.3} parent=5 // pred_fallthru
      _
    %p182 = scmp.le.s32.totalorder 1, %s9
    %p183 = scmp.lt.s32.totalorder %s9, 3
    %p184 = pnand %p182, %p183
    %p185 = pneg %p184
    // Predicated region
    $region29: #{_lambda_.3} parent=5 // pred_check
      _
    $region30: #{_lambda_.3} parent=5 // pred_check_branch
      %187 = sbr.rel (%p184) target = $region32
    $region31: #{_lambda_.3} parent=5 // pred_region
      %s188 = ssub.s32 %s9, 1
      %p189 = scmp.lt.s32.totalorder %s19, 1
      %s190 = scalar_select %p189, %s19, 1
      %p191 = scmp.lt.s32.totalorder %s20, 0
      %s192 = scalar_select %p191, %s20, 0
      %s193 = smul.addr %s192, 32
      %s194 = smul.addr %s190, 32
      %s195 = sadd.s32 %s193, %s194
      %s196 = smul.addr %s195, 4
      %s197 = scalar_lea.vmem %s0, %s196
      %p198 = pneg %p56
      %p199 = pneg %p53
      %p200 = scmp.lt.s32.totalorder %s21, 0
      %s201 = scalar_select %p200, %s21, 0
      %s202 = smul.addr %s201, 4
      %s203 = scalar_lea.vmem %s1, %s202
      %p204 = pneg %p82
      %p205 = pneg %p79
      %p206 = scmp.lt.s32.totalorder %s21, 0
      %s207 = scalar_select %p206, %s21, 0
      %s208 = scalar_lea.vmem %s2, %s207
      %p209 = pneg %p108
      %p210 = pneg %p105
      %p211 = pneg %p138
      %p212 = pneg %p135
      %p213 = scmp.lt.s32.totalorder %s19, 1
      %s214 = scalar_select %p213, %s19, 1
      %p215 = scmp.lt.s32.totalorder %s20, 0
      %s216 = scalar_select %p215, %s20, 0
      %p217 = scmp.lt.s32.totalorder %s21, 0
      %s218 = scalar_select %p217, %s21, 0
      %s219 = smul.addr %s216, 32
      %s220 = sadd.s32 %s218, %s219
      %s221 = smul.addr %s214, 32
      %s222 = sadd.s32 %s220, %s221
      %s223 = smul.addr %s222, 4
      %s224 = scalar_lea.vmem %s3, %s223
      %p225 = scmp.lt.s32.totalorder %s19, 1
      %s226 = scalar_select %p225, %s19, 1
      %p227 = scmp.lt.s32.totalorder %s20, 0
      %s228 = scalar_select %p227, %s20, 0
      %s229 = smul.addr %s228, 32
      %s230 = smul.addr %s226, 32
      %s231 = sadd.s32 %s229, %s230
      %s232 = smul.addr %s231, 4
      %s233 = scalar_lea.vmem %s0, %s232
      %p234 = scmp.lt.s32.totalorder %s21, 0
      %s235 = scalar_select %p234, %s21, 0
      %s236 = smul.addr %s235, 4
      %s237 = scalar_lea.vmem %s1, %s236
      %p238 = scmp.lt.s32.totalorder %s21, 0
      %s239 = scalar_select %p238, %s21, 0
      %s240 = scalar_lea.vmem %s2, %s239
      %p241 = scmp.lt.s32.totalorder %s19, 1
      %s242 = scalar_select %p241, %s19, 1
      %p243 = scmp.lt.s32.totalorder %s20, 0
      %s244 = scalar_select %p243, %s20, 0
      %p245 = scmp.lt.s32.totalorder %s21, 0
      %s246 = scalar_select %p245, %s21, 0
      %s247 = smul.addr %s244, 32
      %s248 = sadd.s32 %s246, %s247
      %s249 = smul.addr %s242, 32
      %s250 = sadd.s32 %s248, %s249
      %s251 = smul.addr %s250, 4
      %s252 = scalar_lea.vmem %s3, %s251
      %v254 = vld [vmem:[%s233] sm:$0xf]
      %v255 = vld [vmem:[%s233 + $0x4] sm:$0xf]
      %v256 = vld [vmem:[%s233 + $0x8] sm:$0xf]
      %v257 = vld [vmem:[%s233 + $0xc] sm:$0xf]
      %v258 = vld [vmem:[%s233 + $0x10] sm:$0xf]
      %v259 = vld [vmem:[%s233 + $0x14] sm:$0xf]
      %v260 = vld [vmem:[%s233 + $0x18] sm:$0xf]
      %v261 = vld [vmem:[%s233 + $0x1c] sm:$0xf]
      %v262 = vld [vmem:[%s233 + $0x20] sm:$0xf]
      %v263 = vld [vmem:[%s233 + $0x24] sm:$0xf]
      %v264 = vld [vmem:[%s233 + $0x28] sm:$0xf]
      %v265 = vld [vmem:[%s233 + $0x2c] sm:$0xf]
      %v266 = vld [vmem:[%s233 + $0x30] sm:$0xf]
      %v267 = vld [vmem:[%s233 + $0x34] sm:$0xf]
      %v268 = vld [vmem:[%s233 + $0x38] sm:$0xf]
      %v269 = vld [vmem:[%s233 + $0x3c] sm:$0xf]
      %v270 = vld [vmem:[%s233 + $0x40] sm:$0xf]
      %v271 = vld [vmem:[%s233 + $0x44] sm:$0xf]
      %v272 = vld [vmem:[%s233 + $0x48] sm:$0xf]
      %v273 = vld [vmem:[%s233 + $0x4c] sm:$0xf]
      %v274 = vld [vmem:[%s233 + $0x50] sm:$0xf]
      %v275 = vld [vmem:[%s233 + $0x54] sm:$0xf]
      %v276 = vld [vmem:[%s233 + $0x58] sm:$0xf]
      %v277 = vld [vmem:[%s233 + $0x5c] sm:$0xf]
      %v278 = vld [vmem:[%s233 + $0x60] sm:$0xf]
      %v279 = vld [vmem:[%s233 + $0x64] sm:$0xf]
      %v280 = vld [vmem:[%s233 + $0x68] sm:$0xf]
      %v281 = vld [vmem:[%s233 + $0x6c] sm:$0xf]
      %v282 = vld [vmem:[%s233 + $0x70] sm:$0xf]
      %v283 = vld [vmem:[%s233 + $0x74] sm:$0xf]
      %v284 = vld [vmem:[%s233 + $0x78] sm:$0xf]
      %v285 = vld [vmem:[%s233 + $0x7c] sm:$0xf]
      %v286 = vld [vmem:[%s237] sm:$0xf]
      %v287 = vld [vmem:[%s237 + $0x4] sm:$0xf]
      %v288 = vld [vmem:[%s237 + $0x8] sm:$0xf]
      %v289 = vld [vmem:[%s237 + $0xc] sm:$0xf]
      %v290 = vld [vmem:[%s237 + $0x10] sm:$0x3]
      %v291 = vld [vmem:[%s240] sm:$0x1]
      %v293 = vlaneseq
      %v294 = vshrl.u32 %v293, 7
      %v295 = vsub.s32 0, %v294
      %v296 = vrot.slane %v291, %v295
      %v330 = vunpack.c.l.b16 %v254
      %v331 = vunpack.c.l.b16 %v255
      %v332 = vunpack.c.l.b16 %v256
      %v333 = vunpack.c.l.b16 %v257
      %v334 = vunpack.c.l.b16 %v258
      %v335 = vunpack.c.l.b16 %v259
      %v336 = vunpack.c.l.b16 %v260
      %v337 = vunpack.c.l.b16 %v261
      %v338 = vunpack.c.l.b16 %v262
      %v339 = vunpack.c.l.b16 %v263
      %v340 = vunpack.c.l.b16 %v264
      %v341 = vunpack.c.l.b16 %v265
      %v342 = vunpack.c.l.b16 %v266
      %v343 = vunpack.c.l.b16 %v267
      %v344 = vunpack.c.l.b16 %v268
      %v345 = vunpack.c.l.b16 %v269
      %v346 = vunpack.c.l.b16 %v270
      %v347 = vunpack.c.l.b16 %v271
      %v348 = vunpack.c.l.b16 %v272
      %v349 = vunpack.c.l.b16 %v273
      %v350 = vunpack.c.l.b16 %v274
      %v351 = vunpack.c.l.b16 %v275
      %v352 = vunpack.c.l.b16 %v276
      %v353 = vunpack.c.l.b16 %v277
      %v354 = vunpack.c.l.b16 %v278
      %v355 = vunpack.c.l.b16 %v279
      %v356 = vunpack.c.l.b16 %v280
      %v357 = vunpack.c.l.b16 %v281
      %v358 = vunpack.c.l.b16 %v282
      %v359 = vunpack.c.l.b16 %v283
      %v360 = vunpack.c.l.b16 %v284
      %v361 = vunpack.c.l.b16 %v285
      %v362 = vpack.c.b16 %v331, %v330
      %v363 = vpack.c.b16 %v333, %v332
      %v364 = vpack.c.b16 %v335, %v334
      %v365 = vpack.c.b16 %v337, %v336
      %v366 = vpack.c.b16 %v339, %v338
      %v367 = vpack.c.b16 %v341, %v340
      %v368 = vpack.c.b16 %v343, %v342
      %v369 = vpack.c.b16 %v345, %v344
      %v370 = vpack.c.b16 %v347, %v346
      %v371 = vpack.c.b16 %v349, %v348
      %v372 = vpack.c.b16 %v351, %v350
      %v373 = vpack.c.b16 %v353, %v352
      %v374 = vpack.c.b16 %v355, %v354
      %v375 = vpack.c.b16 %v357, %v356
      %v376 = vpack.c.b16 %v359, %v358
      %v377 = vpack.c.b16 %v361, %v360
      %v383 = vunpack.c.l.b16 %v286
      %v384 = vunpack.c.l.b16 %v287
      %v385 = vunpack.c.l.b16 %v288
      %v386 = vunpack.c.l.b16 %v289
      %v387 = vunpack.c.l.b16 %v290
      %v388 = vpack.c.b16 %v384, %v383
      %v389 = vpack.c.b16 %v386, %v385
      %v390 = vpack.c.b16 %v387, %v387
      %vm393 = vcmask 293888
      %v395 = vsel %vm393, %v362, 0
      %v398 = vsel %vm393, %v363, 0
      %v401 = vsel %vm393, %v364, 0
      %v404 = vsel %vm393, %v365, 0
      %v407 = vsel %vm393, %v366, 0
      %v410 = vsel %vm393, %v367, 0
      %v413 = vsel %vm393, %v368, 0
      %v416 = vsel %vm393, %v369, 0
      %v419 = vsel %vm393, %v370, 0
      %v422 = vsel %vm393, %v371, 0
      %v425 = vsel %vm393, %v372, 0
      %v428 = vsel %vm393, %v373, 0
      %v431 = vsel %vm393, %v374, 0
      %v434 = vsel %vm393, %v375, 0
      %v437 = vsel %vm393, %v376, 0
      %v440 = vsel %vm393, %v377, 0
      %vm442 = vcmask 1041408
      %v444 = vsel %vm442, %v390, 0
      %446 = vmatprep.subr.bf16.mxu0 0
      %447 = vmatpush1.bf16.msra.mxu0 0
      %448 = vmatprep.subr.bf16.mxu0 0
      %449 = vmatpush1.bf16.msra.mxu0 0
      %450 = vmatprep.subr.bf16.mxu0 0
      %451 = vmatpush1.bf16.msra.mxu0 0
      %452 = vmatprep.subr.bf16.mxu0 0
      %453 = vmatpush1.bf16.msra.mxu0 0
      %454 = vmatprep.subr.bf16.mxu0 0
      %455 = vmatpush1.bf16.msra.mxu0 0
      %456 = vmatprep.subr.bf16.mxu0 0
      %457 = vmatpush1.bf16.msra.mxu0 %v444
      %458 = vmatprep.subr.bf16.mxu0 0
      %459 = vmatpush1.bf16.msra.mxu0 %v389
      %460 = vmatprep.subr.bf16.mxu0 0
      %461 = vmatpush1.bf16.msra.mxu0 %v388
      %462 = vmatprep.subr.bf16.mxu0 0
      %463 = vmatpush2.bf16.msra.mxu0 0
      %464 = vmatprep.subr.bf16.mxu0 0
      %465 = vmatpush2.bf16.msra.mxu0 0
      %466 = vmatprep.subr.bf16.mxu0 0
      %467 = vmatpush2.bf16.msra.mxu0 0
      %468 = vmatprep.subr.bf16.mxu0 0
      %469 = vmatpush2.bf16.msra.mxu0 0
      %470 = vmatprep.subr.bf16.mxu0 0
      %471 = vmatpush2.bf16.msra.mxu0 0
      %472 = vmatprep.subr.bf16.mxu0 0
      %473 = vmatpush2.bf16.msra.mxu0 0
      %474 = vmatprep.subr.bf16.mxu0 0
      %475 = vmatpush2.bf16.msra.mxu0 0
      %476 = vmatprep.subr.bf16.mxu0 0
      %477 = vmatpush2.bf16.msra.mxu0 0
      %478 = vmatprep.mubr.bf16.mxu0 0
      %479 = vmatmul.mubr.bf16.gmra.mxu0 %v395
      %v480 = vpop.f32.mrf.mxu0
      %v481 = vadd.f32 %v296, %v480
      %v482 = vpop.f32.mrf.mxu0
      %v483 = vpop.f32.mrf.mxu0
      %v484 = vadd.f32 %v296, %v483
      %v485 = vpop.f32.mrf.mxu0
      %486 = vmatprep.mubr.bf16.mxu0 0
      %487 = vmatmul.mubr.bf16.gmra.mxu0 %v398
      %v488 = vpop.f32.mrf.mxu0
      %v489 = vadd.f32 %v296, %v488
      %v490 = vpop.f32.mrf.mxu0
      %v491 = vpop.f32.mrf.mxu0
      %v492 = vadd.f32 %v296, %v491
      %v493 = vpop.f32.mrf.mxu0
      %494 = vmatprep.mubr.bf16.mxu0 0
      %495 = vmatmul.mubr.bf16.gmra.mxu0 %v401
      %v496 = vpop.f32.mrf.mxu0
      %v497 = vadd.f32 %v296, %v496
      %v498 = vpop.f32.mrf.mxu0
      %v499 = vpop.f32.mrf.mxu0
      %v500 = vadd.f32 %v296, %v499
      %v501 = vpop.f32.mrf.mxu0
      %502 = vmatprep.mubr.bf16.mxu0 0
      %503 = vmatmul.mubr.bf16.gmra.mxu0 %v404
      %v504 = vpop.f32.mrf.mxu0
      %v505 = vadd.f32 %v296, %v504
      %v506 = vpop.f32.mrf.mxu0
      %v507 = vpop.f32.mrf.mxu0
      %v508 = vadd.f32 %v296, %v507
      %v509 = vpop.f32.mrf.mxu0
      %510 = vmatprep.mubr.bf16.mxu0 0
      %511 = vmatmul.mubr.bf16.gmra.mxu0 %v407
      %v512 = vpop.f32.mrf.mxu0
      %v513 = vadd.f32 %v296, %v512
      %v514 = vpop.f32.mrf.mxu0
      %v515 = vpop.f32.mrf.mxu0
      %v516 = vadd.f32 %v296, %v515
      %v517 = vpop.f32.mrf.mxu0
      %518 = vmatprep.mubr.bf16.mxu0 0
      %519 = vmatmul.mubr.bf16.gmra.mxu0 %v410
      %v520 = vpop.f32.mrf.mxu0
      %v521 = vadd.f32 %v296, %v520
      %v522 = vpop.f32.mrf.mxu0
      %v523 = vpop.f32.mrf.mxu0
      %v524 = vadd.f32 %v296, %v523
      %v525 = vpop.f32.mrf.mxu0
      %526 = vmatprep.mubr.bf16.mxu0 0
      %527 = vmatmul.mubr.bf16.gmra.mxu0 %v413
      %v528 = vpop.f32.mrf.mxu0
      %v529 = vadd.f32 %v296, %v528
      %v530 = vpop.f32.mrf.mxu0
      %v531 = vpop.f32.mrf.mxu0
      %v532 = vadd.f32 %v296, %v531
      %v533 = vpop.f32.mrf.mxu0
      %534 = vmatprep.mubr.bf16.mxu0 0
      %535 = vmatmul.mubr.bf16.gmra.mxu0 %v416
      %v536 = vpop.f32.mrf.mxu0
      %v537 = vadd.f32 %v296, %v536
      %v538 = vpop.f32.mrf.mxu0
      %v539 = vpop.f32.mrf.mxu0
      %v540 = vadd.f32 %v296, %v539
      %v541 = vpop.f32.mrf.mxu0
      %542 = vmatprep.mubr.bf16.mxu0 0
      %543 = vmatmul.mubr.bf16.gmra.mxu0 %v419
      %v544 = vpop.f32.mrf.mxu0
      %v545 = vadd.f32 %v296, %v544
      %v546 = vpop.f32.mrf.mxu0
      %v547 = vpop.f32.mrf.mxu0
      %v548 = vadd.f32 %v296, %v547
      %v549 = vpop.f32.mrf.mxu0
      %550 = vmatprep.mubr.bf16.mxu0 0
      %551 = vmatmul.mubr.bf16.gmra.mxu0 %v422
      %v552 = vpop.f32.mrf.mxu0
      %v553 = vadd.f32 %v296, %v552
      %v554 = vpop.f32.mrf.mxu0
      %v555 = vpop.f32.mrf.mxu0
      %v556 = vadd.f32 %v296, %v555
      %v557 = vpop.f32.mrf.mxu0
      %558 = vmatprep.mubr.bf16.mxu0 0
      %559 = vmatmul.mubr.bf16.gmra.mxu0 %v425
      %v560 = vpop.f32.mrf.mxu0
      %v561 = vadd.f32 %v296, %v560
      %v562 = vpop.f32.mrf.mxu0
      %v563 = vpop.f32.mrf.mxu0
      %v564 = vadd.f32 %v296, %v563
      %v565 = vpop.f32.mrf.mxu0
      %566 = vmatprep.mubr.bf16.mxu0 0
      %567 = vmatmul.mubr.bf16.gmra.mxu0 %v428
      %v568 = vpop.f32.mrf.mxu0
      %v569 = vadd.f32 %v296, %v568
      %v570 = vpop.f32.mrf.mxu0
      %v571 = vpop.f32.mrf.mxu0
      %v572 = vadd.f32 %v296, %v571
      %v573 = vpop.f32.mrf.mxu0
      %574 = vmatprep.mubr.bf16.mxu0 0
      %575 = vmatmul.mubr.bf16.gmra.mxu0 %v431
      %v576 = vpop.f32.mrf.mxu0
      %v577 = vadd.f32 %v296, %v576
      %v578 = vpop.f32.mrf.mxu0
      %v579 = vpop.f32.mrf.mxu0
      %v580 = vadd.f32 %v296, %v579
      %v581 = vpop.f32.mrf.mxu0
      %582 = vmatprep.mubr.bf16.mxu0 0
      %583 = vmatmul.mubr.bf16.gmra.mxu0 %v434
      %v584 = vpop.f32.mrf.mxu0
      %v585 = vadd.f32 %v296, %v584
      %v586 = vpop.f32.mrf.mxu0
      %v587 = vpop.f32.mrf.mxu0
      %v588 = vadd.f32 %v296, %v587
      %v589 = vpop.f32.mrf.mxu0
      %590 = vmatprep.mubr.bf16.mxu0 0
      %591 = vmatmul.mubr.bf16.gmra.mxu0 %v437
      %v592 = vpop.f32.mrf.mxu0
      %v593 = vadd.f32 %v296, %v592
      %v594 = vpop.f32.mrf.mxu0
      %v595 = vpop.f32.mrf.mxu0
      %v596 = vadd.f32 %v296, %v595
      %v597 = vpop.f32.mrf.mxu0
      %598 = vmatprep.mubr.bf16.mxu0 0
      %599 = vmatmul.mubr.bf16.gmra.mxu0 %v440
      %v600 = vpop.f32.mrf.mxu0
      %v601 = vadd.f32 %v296, %v600
      %v602 = vpop.f32.mrf.mxu0
      %v603 = vpop.f32.mrf.mxu0
      %v604 = vadd.f32 %v296, %v603
      %v605 = vpop.f32.mrf.mxu0
      %606 = vdwg.mxu0
      %v607 = vmax.f32 %v481, 0.0
      %v608 = vmax.f32 %v484, 0.0
      %v609 = vmax.f32 %v489, 0.0
      %v610 = vmax.f32 %v492, 0.0
      %v611 = vmax.f32 %v497, 0.0
      %v612 = vmax.f32 %v500, 0.0
      %v613 = vmax.f32 %v505, 0.0
      %v614 = vmax.f32 %v508, 0.0
      %v615 = vmax.f32 %v513, 0.0
      %v616 = vmax.f32 %v516, 0.0
      %v617 = vmax.f32 %v521, 0.0
      %v618 = vmax.f32 %v524, 0.0
      %v619 = vmax.f32 %v529, 0.0
      %v620 = vmax.f32 %v532, 0.0
      %v621 = vmax.f32 %v537, 0.0
      %v622 = vmax.f32 %v540, 0.0
      %v623 = vmax.f32 %v545, 0.0
      %v624 = vmax.f32 %v548, 0.0
      %v625 = vmax.f32 %v553, 0.0
      %v626 = vmax.f32 %v556, 0.0
      %v627 = vmax.f32 %v561, 0.0
      %v628 = vmax.f32 %v564, 0.0
      %v629 = vmax.f32 %v569, 0.0
      %v630 = vmax.f32 %v572, 0.0
      %v631 = vmax.f32 %v577, 0.0
      %v632 = vmax.f32 %v580, 0.0
      %v633 = vmax.f32 %v585, 0.0
      %v634 = vmax.f32 %v588, 0.0
      %v635 = vmax.f32 %v593, 0.0
      %v636 = vmax.f32 %v596, 0.0
      %v637 = vmax.f32 %v601, 0.0
      %v638 = vmax.f32 %v604, 0.0
      %v639 = vpack.c.bf16 %v608, %v607
      %v640 = vpack.c.bf16 %v610, %v609
      %v641 = vpack.c.bf16 %v612, %v611
      %v642 = vpack.c.bf16 %v614, %v613
      %v643 = vpack.c.bf16 %v616, %v615
      %v644 = vpack.c.bf16 %v618, %v617
      %v645 = vpack.c.bf16 %v620, %v619
      %v646 = vpack.c.bf16 %v622, %v621
      %v647 = vpack.c.bf16 %v624, %v623
      %v648 = vpack.c.bf16 %v626, %v625
      %v649 = vpack.c.bf16 %v628, %v627
      %v650 = vpack.c.bf16 %v630, %v629
      %v651 = vpack.c.bf16 %v632, %v631
      %v652 = vpack.c.bf16 %v634, %v633
      %v653 = vpack.c.bf16 %v636, %v635
      %v654 = vpack.c.bf16 %v638, %v637
      %v671 = vunpack.c.l.b16 %v639
      %v672 = vunpack.c.h.b16 %v639
      %v673 = vunpack.c.l.b16 %v640
      %v674 = vunpack.c.h.b16 %v640
      %v675 = vunpack.c.l.b16 %v641
      %v676 = vunpack.c.h.b16 %v641
      %v677 = vunpack.c.l.b16 %v642
      %v678 = vunpack.c.h.b16 %v642
      %v679 = vunpack.c.l.b16 %v643
      %v680 = vunpack.c.h.b16 %v643
      %v681 = vunpack.c.l.b16 %v644
      %v682 = vunpack.c.h.b16 %v644
      %v683 = vunpack.c.l.b16 %v645
      %v684 = vunpack.c.h.b16 %v645
      %v685 = vunpack.c.l.b16 %v646
      %v686 = vunpack.c.h.b16 %v646
      %v687 = vunpack.c.l.b16 %v647
      %v688 = vunpack.c.h.b16 %v647
      %v689 = vunpack.c.l.b16 %v648
      %v690 = vunpack.c.h.b16 %v648
      %v691 = vunpack.c.l.b16 %v649
      %v692 = vunpack.c.h.b16 %v649
      %v693 = vunpack.c.l.b16 %v650
      %v694 = vunpack.c.h.b16 %v650
      %v695 = vunpack.c.l.b16 %v651
      %v696 = vunpack.c.h.b16 %v651
      %v697 = vunpack.c.l.b16 %v652
      %v698 = vunpack.c.h.b16 %v652
      %v699 = vunpack.c.l.b16 %v653
      %v700 = vunpack.c.h.b16 %v653
      %v701 = vunpack.c.l.b16 %v654
      %v702 = vunpack.c.h.b16 %v654
      %v703 = vpack.c.b16 %v671, %v671
      %v704 = vpack.c.b16 %v672, %v672
      %v705 = vpack.c.b16 %v673, %v673
      %v706 = vpack.c.b16 %v674, %v674
      %v707 = vpack.c.b16 %v675, %v675
      %v708 = vpack.c.b16 %v676, %v676
      %v709 = vpack.c.b16 %v677, %v677
      %v710 = vpack.c.b16 %v678, %v678
      %v711 = vpack.c.b16 %v679, %v679
      %v712 = vpack.c.b16 %v680, %v680
      %v713 = vpack.c.b16 %v681, %v681
      %v714 = vpack.c.b16 %v682, %v682
      %v715 = vpack.c.b16 %v683, %v683
      %v716 = vpack.c.b16 %v684, %v684
      %v717 = vpack.c.b16 %v685, %v685
      %v718 = vpack.c.b16 %v686, %v686
      %v719 = vpack.c.b16 %v687, %v687
      %v720 = vpack.c.b16 %v688, %v688
      %v721 = vpack.c.b16 %v689, %v689
      %v722 = vpack.c.b16 %v690, %v690
      %v723 = vpack.c.b16 %v691, %v691
      %v724 = vpack.c.b16 %v692, %v692
      %v725 = vpack.c.b16 %v693, %v693
      %v726 = vpack.c.b16 %v694, %v694
      %v727 = vpack.c.b16 %v695, %v695
      %v728 = vpack.c.b16 %v696, %v696
      %v729 = vpack.c.b16 %v697, %v697
      %v730 = vpack.c.b16 %v698, %v698
      %v731 = vpack.c.b16 %v699, %v699
      %v732 = vpack.c.b16 %v700, %v700
      %v733 = vpack.c.b16 %v701, %v701
      %v734 = vpack.c.b16 %v702, %v702
      %767 = vst [vmem:[%s252] sm:$0xf] %v703
      %768 = vst [vmem:[%s252 + $0x4] sm:$0xf] %v704
      %769 = vst [vmem:[%s252 + $0x8] sm:$0xf] %v705
      %770 = vst [vmem:[%s252 + $0xc] sm:$0xf] %v706
      %771 = vst [vmem:[%s252 + $0x10] sm:$0xf] %v707
      %772 = vst [vmem:[%s252 + $0x14] sm:$0xf] %v708
      %773 = vst [vmem:[%s252 + $0x18] sm:$0xf] %v709
      %774 = vst [vmem:[%s252 + $0x1c] sm:$0xf] %v710
      %775 = vst [vmem:[%s252 + $0x20] sm:$0xf] %v711
      %776 = vst [vmem:[%s252 + $0x24] sm:$0xf] %v712
      %777 = vst [vmem:[%s252 + $0x28] sm:$0xf] %v713
      %778 = vst [vmem:[%s252 + $0x2c] sm:$0xf] %v714
      %779 = vst [vmem:[%s252 + $0x30] sm:$0xf] %v715
      %780 = vst [vmem:[%s252 + $0x34] sm:$0xf] %v716
      %781 = vst [vmem:[%s252 + $0x38] sm:$0xf] %v717
      %782 = vst [vmem:[%s252 + $0x3c] sm:$0xf] %v718
      %783 = vst [vmem:[%s252 + $0x40] sm:$0xf] %v719
      %784 = vst [vmem:[%s252 + $0x44] sm:$0xf] %v720
      %785 = vst [vmem:[%s252 + $0x48] sm:$0xf] %v721
      %786 = vst [vmem:[%s252 + $0x4c] sm:$0xf] %v722
      %787 = vst [vmem:[%s252 + $0x50] sm:$0xf] %v723
      %788 = vst [vmem:[%s252 + $0x54] sm:$0xf] %v724
      %789 = vst [vmem:[%s252 + $0x58] sm:$0xf] %v725
      %790 = vst [vmem:[%s252 + $0x5c] sm:$0xf] %v726
      %791 = vst [vmem:[%s252 + $0x60] sm:$0xf] %v727
      %792 = vst [vmem:[%s252 + $0x64] sm:$0xf] %v728
      %793 = vst [vmem:[%s252 + $0x68] sm:$0xf] %v729
      %794 = vst [vmem:[%s252 + $0x6c] sm:$0xf] %v730
      %795 = vst [vmem:[%s252 + $0x70] sm:$0xf] %v731
      %796 = vst [vmem:[%s252 + $0x74] sm:$0xf] %v732
      %797 = vst [vmem:[%s252 + $0x78] sm:$0xf] %v733
      %798 = vst [vmem:[%s252 + $0x7c] sm:$0xf] %v734
      %p799 = scmp.lt.s32.totalorder %s19, 1
      %s800 = scalar_select %p799, %s19, 1
      %p801 = scmp.lt.s32.totalorder %s20, 0
      %s802 = scalar_select %p801, %s20, 0
      %p803 = scmp.lt.s32.totalorder %s21, 0
      %s804 = scalar_select %p803, %s21, 0
      %s805 = smul.addr %s802, 32
      %s806 = sadd.s32 %s804, %s805
      %s807 = smul.addr %s800, 32
      %s808 = sadd.s32 %s806, %s807
      %s809 = smul.addr %s808, 4
      %s810 = scalar_lea.vmem %s3, %s809
      // Predicated region
      $region33: #{_lambda_.3} parent=31 // pred_check
        %p811 = pneg %p135
      $region34: #{_lambda_.3} parent=31 // pred_check_branch
        %813 = sbr.rel (%p811) target = $region36
      $region35: #{_lambda_.3} parent=31 // pred_region
        _
      $region36: #{_lambda_.3} parent=31 // pred_fallthru
        _
    $region32: #{_lambda_.3} parent=5 // pred_fallthru
      _
    %p814 = scmp.le.s32.totalorder 2, %s9
    // Predicated region
    $region37: #{_lambda_.3} parent=5 // pred_check
      %p815 = pneg %p814
    $region38: #{_lambda_.3} parent=5 // pred_check_branch
      %817 = sbr.rel (%p815) target = $region40
    $region39: #{_lambda_.3} parent=5 // pred_region
      %s818 = ssub.s32 %s9, 2
      // Predicated region
      $region41: #{_lambda_.3} parent=39 // pred_check
        %p819 = pneg %p141
      $region42: #{_lambda_.3} parent=39 // pred_check_branch
        %821 = sbr.rel (%p819) target = $region44
      $region43: #{_lambda_.3} parent=39 // pred_region
        %p822 = scmp.lt.s32.totalorder %s22, 1
        %s823 = scalar_select %p822, %s22, 1
        %p824 = scmp.lt.s32.totalorder %s23, 0
        %s825 = scalar_select %p824, %s23, 0
        %p826 = scmp.lt.s32.totalorder %s24, 0
        %s827 = scalar_select %p826, %s24, 0
        %s828 = smul.addr %s825, 32
        %s829 = sadd.s32 %s827, %s828
        %s830 = smul.addr %s823, 32
        %s831 = sadd.s32 %s829, %s830
        %s832 = smul.addr %s831, 4
        %s833 = scalar_lea.vmem %s3, %s832
      $region44: #{_lambda_.3} parent=39 // pred_fallthru
        _
    $region40: #{_lambda_.3} parent=5 // pred_fallthru
      _
  $region6: #{_lambda_.3} parent=0 // loop_footer
    %s13 = sadd.s32 1, %s9
  $region7: #{_lambda_.3} parent=0 // loop_footer_branch
    %8 = sbr.rel target = $region3
  $region8: #{_lambda_.3} parent=0 // loop_exit
    _

// kernel: _lambda_.5
$region0: #{_lambda_.5}
  #allocation0 [shape = 'u32[]', space=smem, size = 0x4, offset = 0x4, fixed_abs, tag = 'smem constant byte address 0x4 - core index']
  #allocation1 [shape = 'u32[144,128]{1,0:T(1,128)}', space=vmem, size = 0x12000, scoped, tag = 'internal scratch']
  %s0 = inlined_call_operand.vmem [shape: bf16[2,1,2,72,384], index: 0, kind: input, shape index: {}]
  %s1 = inlined_call_operand.vmem [shape: bf16[3,384,128], index: 1, kind: input, shape index: {}]
  %s2 = inlined_call_operand.vmem [shape: f32[1,128], index: 2, kind: input, shape index: {}]
  %s3 = inlined_call_operand.vmem [shape: bf16[2,1,64,128], index: 3, kind: input, shape index: {}]
  %s4 = inlined_call_operand.vmem [shape: bf16[2,1,64,128], index: 4, kind: output, shape index: {}]
  %s5 = sld [smem:[#allocation0]]
  $region49: #{_lambda_.5} parent=0
    _
  %s7 = ssub.s32 1, %s5
  %s8 = scalar_select 0, %s7, %s5
  loop: start=0, step=1, limit=4
  $region2: #{_lambda_.5} parent=0 // loop_pre_header
    _
  $region3: #{_lambda_.5} parent=0 // loop_header
    %s10 = sphi 0, %s14
    %p11 = scmp.ge.s32.totalorder %s10, 4
    %s17 = sphi 0, %s36
    %s18 = sphi 0, %s32
    %s19 = sphi 0, %s28
    %s20 = sphi 0, %s17
    %s21 = sphi 0, %s18
    %s22 = sphi 0, %s19
    %s23 = sphi 0, %s20
    %s24 = sphi 0, %s21
    %s25 = sphi 0, %s22
    %s41 = sphi 0, %s43
    %s44 = sphi 0, %s41
    %s45 = sphi 0, %s44
    %s61 = sphi 0, %s45
    %s67 = sphi 0, %s69
    %s70 = sphi 0, %s67
    %s71 = sphi 0, %s70
    %s87 = sphi 0, %s71
    %s93 = sphi 0, %s95
    %s96 = sphi 0, %s93
    %s97 = sphi 0, %s96
    %s113 = sphi 0, %s97
    %s123 = sphi 0, %s125
    %s126 = sphi 0, %s123
    %s127 = sphi 0, %s126
    %s143 = sphi 0, %s127
    %s153 = sphi 0, %s155
    %s156 = sphi 0, %s153
    %s157 = sphi 0, %s156
    %s173 = sphi 0, %s157
  $region4: #{_lambda_.5} parent=0 // loop_header_branch
    %13 = sbr.rel (%p11) target = $region8
  $region5: #{_lambda_.5} parent=0 // loop_body
    %s15 = ssub.s32 %s10, 1
    %s16 = ssub.s32 %s10, 2
    %s26 = sadd.s32 1, %s19
    %p27 = scmp.ge.s32.totalorder %s26, 1
    %s28 = scalar_select %p27, 0, %s26
    %s29 = sadd.s32 1, %s18
    %s30 = scalar_select %p27, %s29, %s18
    %p31 = scmp.ge.s32.totalorder %s30, 1
    %s32 = scalar_select %p31, 0, %s30
    %s33 = sadd.s32 1, %s17
    %s34 = scalar_select %p31, %s33, %s17
    %p35 = scmp.ge.s32.totalorder %s34, 2
    %s36 = scalar_select %p35, 0, %s34
    %s37 = ssub.s32 %s17, %s36
    %s38 = ssub.s32 %s18, %s32
    %s39 = sor.u32 %s37, %s38
    %p40 = scmp.eq.s32.totalorder %s39, 0
    %s42 = sadd.s32 %s41, 1
    %s43 = scalar_select %p40, %s41, %s42
    %p46 = pneg %p40
    %p47 = scmp.eq.s32.totalorder %s10, 1
    %p48 = por %p46, %p47
    %p49 = scmp.ne.s32.totalorder %s41, %s44
    %p50 = scmp.eq.s32.totalorder %s10, 0
    %p51 = por %p49, %p50
    %p52 = scmp.ne.s32.totalorder %s41, %s44
    %p53 = scmp.eq.s32.totalorder %s15, 1
    %p54 = por %p52, %p53
    %p55 = scmp.ne.s32.totalorder %s44, %s45
    %p56 = scmp.eq.s32.totalorder %s15, 0
    %p57 = por %p55, %p56
    %p58 = scmp.ne.s32.totalorder %s44, %s45
    %p59 = scmp.eq.s32.totalorder %s16, 1
    %p60 = por %p58, %p59
    %p62 = scmp.ne.s32.totalorder %s45, %s61
    %p63 = scmp.eq.s32.totalorder %s16, 0
    %p64 = por %p62, %p63
    %s65 = ssub.s32 %s19, %s28
    %p66 = scmp.eq.s32.totalorder %s65, 0
    %s68 = sadd.s32 %s67, 1
    %s69 = scalar_select %p66, %s67, %s68
    %p72 = pneg %p66
    %p73 = scmp.eq.s32.totalorder %s10, 1
    %p74 = por %p72, %p73
    %p75 = scmp.ne.s32.totalorder %s67, %s70
    %p76 = scmp.eq.s32.totalorder %s10, 0
    %p77 = por %p75, %p76
    %p78 = scmp.ne.s32.totalorder %s67, %s70
    %p79 = scmp.eq.s32.totalorder %s15, 1
    %p80 = por %p78, %p79
    %p81 = scmp.ne.s32.totalorder %s70, %s71
    %p82 = scmp.eq.s32.totalorder %s15, 0
    %p83 = por %p81, %p82
    %p84 = scmp.ne.s32.totalorder %s70, %s71
    %p85 = scmp.eq.s32.totalorder %s16, 1
    %p86 = por %p84, %p85
    %p88 = scmp.ne.s32.totalorder %s71, %s87
    %p89 = scmp.eq.s32.totalorder %s16, 0
    %p90 = por %p88, %p89
    %s91 = ssub.s32 %s19, %s28
    %p92 = scmp.eq.s32.totalorder %s91, 0
    %s94 = sadd.s32 %s93, 1
    %s95 = scalar_select %p92, %s93, %s94
    %p98 = pneg %p92
    %p99 = scmp.eq.s32.totalorder %s10, 1
    %p100 = por %p98, %p99
    %p101 = scmp.ne.s32.totalorder %s93, %s96
    %p102 = scmp.eq.s32.totalorder %s10, 0
    %p103 = por %p101, %p102
    %p104 = scmp.ne.s32.totalorder %s93, %s96
    %p105 = scmp.eq.s32.totalorder %s15, 1
    %p106 = por %p104, %p105
    %p107 = scmp.ne.s32.totalorder %s96, %s97
    %p108 = scmp.eq.s32.totalorder %s15, 0
    %p109 = por %p107, %p108
    %p110 = scmp.ne.s32.totalorder %s96, %s97
    %p111 = scmp.eq.s32.totalorder %s16, 1
    %p112 = por %p110, %p111
    %p114 = scmp.ne.s32.totalorder %s97, %s113
    %p115 = scmp.eq.s32.totalorder %s16, 0
    %p116 = por %p114, %p115
    %s117 = ssub.s32 %s17, %s36
    %s118 = ssub.s32 %s18, %s32
    %s119 = sor.u32 %s117, %s118
    %s120 = ssub.s32 %s19, %s28
    %s121 = sor.u32 %s119, %s120
    %p122 = scmp.eq.s32.totalorder %s121, 0
    %s124 = sadd.s32 %s123, 1
    %s125 = scalar_select %p122, %s123, %s124
    %p128 = pneg %p122
    %p129 = scmp.eq.s32.totalorder %s10, 1
    %p130 = por %p128, %p129
    %p131 = scmp.ne.s32.totalorder %s123, %s126
    %p132 = scmp.eq.s32.totalorder %s10, 0
    %p133 = por %p131, %p132
    %p134 = scmp.ne.s32.totalorder %s123, %s126
    %p135 = scmp.eq.s32.totalorder %s15, 1
    %p136 = por %p134, %p135
    %p137 = scmp.ne.s32.totalorder %s126, %s127
    %p138 = scmp.eq.s32.totalorder %s15, 0
    %p139 = por %p137, %p138
    %p140 = scmp.ne.s32.totalorder %s126, %s127
    %p141 = scmp.eq.s32.totalorder %s16, 1
    %p142 = por %p140, %p141
    %p144 = scmp.ne.s32.totalorder %s127, %s143
    %p145 = scmp.eq.s32.totalorder %s16, 0
    %p146 = por %p144, %p145
    %s147 = ssub.s32 %s17, %s36
    %s148 = ssub.s32 %s18, %s32
    %s149 = sor.u32 %s147, %s148
    %s150 = ssub.s32 %s19, %s28
    %s151 = sor.u32 %s149, %s150
    %p152 = scmp.eq.s32.totalorder %s151, 0
    %s154 = sadd.s32 %s153, 1
    %s155 = scalar_select %p152, %s153, %s154
    %p158 = pneg %p152
    %p159 = scmp.eq.s32.totalorder %s10, 1
    %p160 = por %p158, %p159
    %p161 = scmp.ne.s32.totalorder %s153, %s156
    %p162 = scmp.eq.s32.totalorder %s10, 0
    %p163 = por %p161, %p162
    %p164 = scmp.ne.s32.totalorder %s153, %s156
    %p165 = scmp.eq.s32.totalorder %s15, 1
    %p166 = por %p164, %p165
    %p167 = scmp.ne.s32.totalorder %s156, %s157
    %p168 = scmp.eq.s32.totalorder %s15, 0
    %p169 = por %p167, %p168
    %p170 = scmp.ne.s32.totalorder %s156, %s157
    %p171 = scmp.eq.s32.totalorder %s16, 1
    %p172 = por %p170, %p171
    %p174 = scmp.ne.s32.totalorder %s157, %s173
    %p175 = scmp.eq.s32.totalorder %s16, 0
    %p176 = por %p174, %p175
    %p177 = scmp.le.s32.totalorder 1, %s10
    %p178 = scmp.lt.s32.totalorder %s10, 3
    %p179 = pnand %p177, %p178
    %p180 = pneg %p179
    // Predicated region
    $region9: #{_lambda_.5} parent=5 // pred_check
      _
    $region10: #{_lambda_.5} parent=5 // pred_check_branch
      %182 = sbr.rel (%p179) target = $region12
    $region11: #{_lambda_.5} parent=5 // pred_region
      %s183 = ssub.s32 %s10, 1
      // Predicated region
      $region13: #{_lambda_.5} parent=11 // pred_check
        %p184 = pneg %p83
      $region14: #{_lambda_.5} parent=11 // pred_check_branch
        %186 = sbr.rel (%p184) target = $region16
      $region15: #{_lambda_.5} parent=11 // pred_region
        %p187 = scmp.lt.s32.totalorder %s22, 0
        %s188 = scalar_select %p187, %s22, 0
        %s189 = smul.addr %s188, 4
        %s190 = scalar_lea.vmem %s1, %s189
      $region16: #{_lambda_.5} parent=11 // pred_fallthru
        _
      // Predicated region
      $region17: #{_lambda_.5} parent=11 // pred_check
        %p191 = pneg %p109
      $region18: #{_lambda_.5} parent=11 // pred_check_branch
        %193 = sbr.rel (%p191) target = $region20
      $region19: #{_lambda_.5} parent=11 // pred_region
        %p194 = scmp.lt.s32.totalorder %s22, 0
        %s195 = scalar_select %p194, %s22, 0
        %s196 = scalar_lea.vmem %s2, %s195
      $region20: #{_lambda_.5} parent=11 // pred_fallthru
        _
    $region12: #{_lambda_.5} parent=5 // pred_fallthru
      _
    %p197 = scmp.lt.s32.totalorder %s10, 2
    // Predicated region
    $region21: #{_lambda_.5} parent=5 // pred_check
      %p198 = pneg %p197
    $region22: #{_lambda_.5} parent=5 // pred_check_branch
      %200 = sbr.rel (%p198) target = $region24
    $region23: #{_lambda_.5} parent=5 // pred_region
      // Predicated region
      $region25: #{_lambda_.5} parent=23 // pred_check
        %p201 = pneg %p51
      $region26: #{_lambda_.5} parent=23 // pred_check_branch
        %203 = sbr.rel (%p201) target = $region28
      $region27: #{_lambda_.5} parent=23 // pred_region
        %p204 = scmp.lt.s32.totalorder %s17, 1
        %s205 = scalar_select %p204, %s17, 1
        %p206 = scmp.lt.s32.totalorder %s18, 0
        %s207 = scalar_select %p206, %s18, 0
        %s208 = smul.addr %s207, 54
        %s209 = smul.addr %s205, 54
        %s210 = sadd.s32 %s208, %s209
        %s211 = smul.addr %s210, 4
        %s212 = scalar_lea.vmem %s0, %s211
      $region28: #{_lambda_.5} parent=23 // pred_fallthru
        _
      // Predicated region
      $region29: #{_lambda_.5} parent=23 // pred_check
        %p213 = pneg %p133
      $region30: #{_lambda_.5} parent=23 // pred_check_branch
        %215 = sbr.rel (%p213) target = $region32
      $region31: #{_lambda_.5} parent=23 // pred_region
        %p216 = scmp.lt.s32.totalorder %s17, 1
        %s217 = scalar_select %p216, %s17, 1
        %p218 = scmp.lt.s32.totalorder %s18, 0
        %s219 = scalar_select %p218, %s18, 0
        %p220 = scmp.lt.s32.totalorder %s19, 0
        %s221 = scalar_select %p220, %s19, 0
        %s222 = smul.addr %s219, 8
        %s223 = sadd.s32 %s221, %s222
        %s224 = smul.addr %s217, 8
        %s225 = sadd.s32 %s223, %s224
        %s226 = smul.addr %s225, 4
        %s227 = scalar_lea.vmem %s3, %s226
      $region32: #{_lambda_.5} parent=23 // pred_fallthru
        _
    $region24: #{_lambda_.5} parent=5 // pred_fallthru
      _
    %p228 = scmp.le.s32.totalorder 1, %s10
    %p229 = scmp.lt.s32.totalorder %s10, 3
    %p230 = pnand %p228, %p229
    %p231 = pneg %p230
    // Predicated region
    $region33: #{_lambda_.5} parent=5 // pred_check
      _
    $region34: #{_lambda_.5} parent=5 // pred_check_branch
      %233 = sbr.rel (%p230) target = $region36
    $region35: #{_lambda_.5} parent=5 // pred_region
      %s234 = ssub.s32 %s10, 1
      %p235 = scmp.lt.s32.totalorder %s20, 1
      %s236 = scalar_select %p235, %s20, 1
      %p237 = scmp.lt.s32.totalorder %s21, 0
      %s238 = scalar_select %p237, %s21, 0
      %s239 = smul.addr %s238, 54
      %s240 = smul.addr %s236, 54
      %s241 = sadd.s32 %s239, %s240
      %s242 = smul.addr %s241, 4
      %s243 = scalar_lea.vmem %s0, %s242
      %p244 = pneg %p57
      %p245 = pneg %p54
      %p246 = scmp.lt.s32.totalorder %s22, 0
      %s247 = scalar_select %p246, %s22, 0
      %s248 = smul.addr %s247, 4
      %s249 = scalar_lea.vmem %s1, %s248
      %p250 = pneg %p83
      %p251 = pneg %p80
      %p252 = scmp.lt.s32.totalorder %s22, 0
      %s253 = scalar_select %p252, %s22, 0
      %s254 = scalar_lea.vmem %s2, %s253
      %p255 = pneg %p109
      %p256 = pneg %p106
      %p257 = scmp.lt.s32.totalorder %s20, 1
      %s258 = scalar_select %p257, %s20, 1
      %p259 = scmp.lt.s32.totalorder %s21, 0
      %s260 = scalar_select %p259, %s21, 0
      %p261 = scmp.lt.s32.totalorder %s22, 0
      %s262 = scalar_select %p261, %s22, 0
      %s263 = smul.addr %s260, 8
      %s264 = sadd.s32 %s262, %s263
      %s265 = smul.addr %s258, 8
      %s266 = sadd.s32 %s264, %s265
      %s267 = smul.addr %s266, 4
      %s268 = scalar_lea.vmem %s3, %s267
      %p269 = pneg %p139
      %p270 = pneg %p136
      %p271 = pneg %p169
      %p272 = pneg %p166
      %p273 = scmp.lt.s32.totalorder %s20, 1
      %s274 = scalar_select %p273, %s20, 1
      %p275 = scmp.lt.s32.totalorder %s21, 0
      %s276 = scalar_select %p275, %s21, 0
      %p277 = scmp.lt.s32.totalorder %s22, 0
      %s278 = scalar_select %p277, %s22, 0
      %s279 = smul.addr %s276, 8
      %s280 = sadd.s32 %s278, %s279
      %s281 = smul.addr %s274, 8
      %s282 = sadd.s32 %s280, %s281
      %s283 = smul.addr %s282, 4
      %s284 = scalar_lea.vmem %s4, %s283
      %p285 = scmp.lt.s32.totalorder %s20, 1
      %s286 = scalar_select %p285, %s20, 1
      %p287 = scmp.lt.s32.totalorder %s21, 0
      %s288 = scalar_select %p287, %s21, 0
      %s289 = smul.addr %s288, 54
      %s290 = smul.addr %s286, 54
      %s291 = sadd.s32 %s289, %s290
      %s292 = smul.addr %s291, 4
      %s293 = scalar_lea.vmem %s0, %s292
      %p294 = scmp.lt.s32.totalorder %s22, 0
      %s295 = scalar_select %p294, %s22, 0
      %s296 = smul.addr %s295, 4
      %s297 = scalar_lea.vmem %s1, %s296
      %p298 = scmp.lt.s32.totalorder %s22, 0
      %s299 = scalar_select %p298, %s22, 0
      %s300 = scalar_lea.vmem %s2, %s299
      %p301 = scmp.lt.s32.totalorder %s20, 1
      %s302 = scalar_select %p301, %s20, 1
      %p303 = scmp.lt.s32.totalorder %s21, 0
      %s304 = scalar_select %p303, %s21, 0
      %p305 = scmp.lt.s32.totalorder %s22, 0
      %s306 = scalar_select %p305, %s22, 0
      %s307 = smul.addr %s304, 8
      %s308 = sadd.s32 %s306, %s307
      %s309 = smul.addr %s302, 8
      %s310 = sadd.s32 %s308, %s309
      %s311 = smul.addr %s310, 4
      %s312 = scalar_lea.vmem %s3, %s311
      %p313 = scmp.lt.s32.totalorder %s20, 1
      %s314 = scalar_select %p313, %s20, 1
      %p315 = scmp.lt.s32.totalorder %s21, 0
      %s316 = scalar_select %p315, %s21, 0
      %p317 = scmp.lt.s32.totalorder %s22, 0
      %s318 = scalar_select %p317, %s22, 0
      %s319 = smul.addr %s316, 8
      %s320 = sadd.s32 %s318, %s319
      %s321 = smul.addr %s314, 8
      %s322 = sadd.s32 %s320, %s321
      %s323 = smul.addr %s322, 4
      %s324 = scalar_lea.vmem %s4, %s323
      %v326 = vld [vmem:[%s293] sm:$0xff]
      %v327 = vld [vmem:[%s293 + $0x8] sm:$0xf]
      %v328 = vld [vmem:[%s293 + $0xc] sm:$0xff]
      %v329 = vld [vmem:[%s293 + $0x14] sm:$0xf]
      %v330 = vld [vmem:[%s293 + $0x18] sm:$0xff]
      %v331 = vld [vmem:[%s293 + $0x20] sm:$0xf]
      %v332 = vld [vmem:[%s293 + $0x24] sm:$0xff]
      %v333 = vld [vmem:[%s293 + $0x2c] sm:$0xf]
      %v334 = vld [vmem:[%s293 + $0x30] sm:$0xff]
      %v335 = vld [vmem:[%s293 + $0x38] sm:$0xf]
      %v336 = vld [vmem:[%s293 + $0x3c] sm:$0xff]
      %v337 = vld [vmem:[%s293 + $0x44] sm:$0xf]
      %v338 = vld [vmem:[%s293 + $0x48] sm:$0xff]
      %v339 = vld [vmem:[%s293 + $0x50] sm:$0xf]
      %v340 = vld [vmem:[%s293 + $0x54] sm:$0xff]
      %v341 = vld [vmem:[%s293 + $0x5c] sm:$0xf]
      %v342 = vld [vmem:[%s297] sm:$0xf]
      %v343 = vld [vmem:[%s297 + $0x4] sm:$0xf]
      %v344 = vld [vmem:[%s297 + $0x8] sm:$0xf]
      %v345 = vld [vmem:[%s297 + $0xc] sm:$0xf]
      %v346 = vld [vmem:[%s297 + $0x10] sm:$0xf]
      %v347 = vld [vmem:[%s297 + $0x14] sm:$0xf]
      %v348 = vld [vmem:[%s297 + $0x18] sm:$0xf]
      %v349 = vld [vmem:[%s297 + $0x1c] sm:$0xf]
      %v350 = vld [vmem:[%s297 + $0x20] sm:$0xf]
      %v351 = vld [vmem:[%s297 + $0x24] sm:$0xf]
      %v352 = vld [vmem:[%s297 + $0x28] sm:$0xf]
      %v353 = vld [vmem:[%s297 + $0x2c] sm:$0xf]
      %v354 = vld [vmem:[%s297 + $0x30] sm:$0xf]
      %v355 = vld [vmem:[%s297 + $0x34] sm:$0xf]
      %v356 = vld [vmem:[%s297 + $0x38] sm:$0xf]
      %v357 = vld [vmem:[%s297 + $0x3c] sm:$0xf]
      %v358 = vld [vmem:[%s297 + $0x40] sm:$0xf]
      %v359 = vld [vmem:[%s297 + $0x44] sm:$0xf]
      %v360 = vld [vmem:[%s297 + $0x48] sm:$0xf]
      %v361 = vld [vmem:[%s297 + $0x4c] sm:$0xf]
      %v362 = vld [vmem:[%s297 + $0x50] sm:$0xf]
      %v363 = vld [vmem:[%s297 + $0x54] sm:$0xf]
      %v364 = vld [vmem:[%s297 + $0x58] sm:$0xf]
      %v365 = vld [vmem:[%s297 + $0x5c] sm:$0xf]
      %v366 = vld [vmem:[%s297 + $0x60] sm:$0xf]
      %v367 = vld [vmem:[%s297 + $0x64] sm:$0xf]
      %v368 = vld [vmem:[%s297 + $0x68] sm:$0xf]
      %v369 = vld [vmem:[%s297 + $0x6c] sm:$0xf]
      %v370 = vld [vmem:[%s297 + $0x70] sm:$0xf]
      %v371 = vld [vmem:[%s297 + $0x74] sm:$0xf]
      %v372 = vld [vmem:[%s297 + $0x78] sm:$0xf]
      %v373 = vld [vmem:[%s297 + $0x7c] sm:$0xf]
      %v374 = vld [vmem:[%s297 + $0x80] sm:$0xf]
      %v375 = vld [vmem:[%s297 + $0x84] sm:$0xf]
      %v376 = vld [vmem:[%s297 + $0x88] sm:$0xf]
      %v377 = vld [vmem:[%s297 + $0x8c] sm:$0xf]
      %v378 = vld [vmem:[%s297 + $0x90] sm:$0xf]
      %v379 = vld [vmem:[%s297 + $0x94] sm:$0xf]
      %v380 = vld [vmem:[%s297 + $0x98] sm:$0xf]
      %v381 = vld [vmem:[%s297 + $0x9c] sm:$0xf]
      %v382 = vld [vmem:[%s297 + $0xa0] sm:$0xf]
      %v383 = vld [vmem:[%s297 + $0xa4] sm:$0xf]
      %v384 = vld [vmem:[%s297 + $0xa8] sm:$0xf]
      %v385 = vld [vmem:[%s297 + $0xac] sm:$0xf]
      %v386 = vld [vmem:[%s297 + $0xb0] sm:$0xf]
      %v387 = vld [vmem:[%s297 + $0xb4] sm:$0xf]
      %v388 = vld [vmem:[%s297 + $0xb8] sm:$0xf]
      %v389 = vld [vmem:[%s297 + $0xbc] sm:$0xf]
      %s390 = scalar_lea.vmem %s293, 108
      %v391 = vld [vmem:[%s390] sm:$0xff]
      %v392 = vld [vmem:[%s390 + $0x8] sm:$0xf]
      %v393 = vld [vmem:[%s390 + $0xc] sm:$0xff]
      %v394 = vld [vmem:[%s390 + $0x14] sm:$0xf]
      %v395 = vld [vmem:[%s390 + $0x18] sm:$0xff]
      %v396 = vld [vmem:[%s390 + $0x20] sm:$0xf]
      %v397 = vld [vmem:[%s390 + $0x24] sm:$0xff]
      %v398 = vld [vmem:[%s390 + $0x2c] sm:$0xf]
      %v399 = vld [vmem:[%s390 + $0x30] sm:$0xff]
      %v400 = vld [vmem:[%s390 + $0x38] sm:$0xf]
      %v401 = vld [vmem:[%s390 + $0x3c] sm:$0xff]
      %v402 = vld [vmem:[%s390 + $0x44] sm:$0xf]
      %v403 = vld [vmem:[%s390 + $0x48] sm:$0xff]
      %v404 = vld [vmem:[%s390 + $0x50] sm:$0xf]
      %v405 = vld [vmem:[%s390 + $0x54] sm:$0xff]
      %v406 = vld [vmem:[%s390 + $0x5c] sm:$0xf]
      %s407 = scalar_lea.vmem %s297, 192
      %v408 = vld [vmem:[%s407] sm:$0xf]
      %v409 = vld [vmem:[%s407 + $0x4] sm:$0xf]
      %v410 = vld [vmem:[%s407 + $0x8] sm:$0xf]
      %v411 = vld [vmem:[%s407 + $0xc] sm:$0xf]
      %v412 = vld [vmem:[%s407 + $0x10] sm:$0xf]
      %v413 = vld [vmem:[%s407 + $0x14] sm:$0xf]
      %v414 = vld [vmem:[%s407 + $0x18] sm:$0xf]
      %v415 = vld [vmem:[%s407 + $0x1c] sm:$0xf]
      %v416 = vld [vmem:[%s407 + $0x20] sm:$0xf]
      %v417 = vld [vmem:[%s407 + $0x24] sm:$0xf]
      %v418 = vld [vmem:[%s407 + $0x28] sm:$0xf]
      %v419 = vld [vmem:[%s407 + $0x2c] sm:$0xf]
      %v420 = vld [vmem:[%s407 + $0x30] sm:$0xf]
      %v421 = vld [vmem:[%s407 + $0x34] sm:$0xf]
      %v422 = vld [vmem:[%s407 + $0x38] sm:$0xf]
      %v423 = vld [vmem:[%s407 + $0x3c] sm:$0xf]
      %v424 = vld [vmem:[%s407 + $0x40] sm:$0xf]
      %v425 = vld [vmem:[%s407 + $0x44] sm:$0xf]
      %v426 = vld [vmem:[%s407 + $0x48] sm:$0xf]
      %v427 = vld [vmem:[%s407 + $0x4c] sm:$0xf]
      %v428 = vld [vmem:[%s407 + $0x50] sm:$0xf]
      %v429 = vld [vmem:[%s407 + $0x54] sm:$0xf]
      %v430 = vld [vmem:[%s407 + $0x58] sm:$0xf]
      %v431 = vld [vmem:[%s407 + $0x5c] sm:$0xf]
      %v432 = vld [vmem:[%s407 + $0x60] sm:$0xf]
      %v433 = vld [vmem:[%s407 + $0x64] sm:$0xf]
      %v434 = vld [vmem:[%s407 + $0x68] sm:$0xf]
      %v435 = vld [vmem:[%s407 + $0x6c] sm:$0xf]
      %v436 = vld [vmem:[%s407 + $0x70] sm:$0xf]
      %v437 = vld [vmem:[%s407 + $0x74] sm:$0xf]
      %v438 = vld [vmem:[%s407 + $0x78] sm:$0xf]
      %v439 = vld [vmem:[%s407 + $0x7c] sm:$0xf]
      %v440 = vld [vmem:[%s407 + $0x80] sm:$0xf]
      %v441 = vld [vmem:[%s407 + $0x84] sm:$0xf]
      %v442 = vld [vmem:[%s407 + $0x88] sm:$0xf]
      %v443 = vld [vmem:[%s407 + $0x8c] sm:$0xf]
      %v444 = vld [vmem:[%s407 + $0x90] sm:$0xf]
      %v445 = vld [vmem:[%s407 + $0x94] sm:$0xf]
      %v446 = vld [vmem:[%s407 + $0x98] sm:$0xf]
      %v447 = vld [vmem:[%s407 + $0x9c] sm:$0xf]
      %v448 = vld [vmem:[%s407 + $0xa0] sm:$0xf]
      %v449 = vld [vmem:[%s407 + $0xa4] sm:$0xf]
      %v450 = vld [vmem:[%s407 + $0xa8] sm:$0xf]
      %v451 = vld [vmem:[%s407 + $0xac] sm:$0xf]
      %v452 = vld [vmem:[%s407 + $0xb0] sm:$0xf]
      %v453 = vld [vmem:[%s407 + $0xb4] sm:$0xf]
      %v454 = vld [vmem:[%s407 + $0xb8] sm:$0xf]
      %v455 = vld [vmem:[%s407 + $0xbc] sm:$0xf]
      %v472 = vunpack.c.l.b16 %v391
      %v473 = vunpack.c.h.b16 %v391
      %v474 = vunpack.c.l.b16 %v392
      %v475 = vunpack.c.l.b16 %v393
      %v476 = vunpack.c.h.b16 %v393
      %v477 = vunpack.c.l.b16 %v394
      %v478 = vunpack.c.l.b16 %v395
      %v479 = vunpack.c.h.b16 %v395
      %v480 = vunpack.c.l.b16 %v396
      %v481 = vunpack.c.l.b16 %v397
      %v482 = vunpack.c.h.b16 %v397
      %v483 = vunpack.c.l.b16 %v398
      %v484 = vunpack.c.l.b16 %v399
      %v485 = vunpack.c.h.b16 %v399
      %v486 = vunpack.c.l.b16 %v400
      %v487 = vunpack.c.l.b16 %v401
      %v488 = vunpack.c.h.b16 %v401
      %v489 = vunpack.c.l.b16 %v402
      %v490 = vunpack.c.l.b16 %v403
      %v491 = vunpack.c.h.b16 %v403
      %v492 = vunpack.c.l.b16 %v404
      %v493 = vunpack.c.l.b16 %v405
      %v494 = vunpack.c.h.b16 %v405
      %v495 = vunpack.c.l.b16 %v406
      %v496 = vpack.c.b16 %v475, %v472
      %v497 = vpack.c.b16 %v476, %v473
      %v498 = vpack.c.b16 %v477, %v474
      %v499 = vpack.c.b16 %v481, %v478
      %v500 = vpack.c.b16 %v482, %v479
      %v501 = vpack.c.b16 %v483, %v480
      %v502 = vpack.c.b16 %v487, %v484
      %v503 = vpack.c.b16 %v488, %v485
      %v504 = vpack.c.b16 %v489, %v486
      %v505 = vpack.c.b16 %v493, %v490
      %v506 = vpack.c.b16 %v494, %v491
      %v507 = vpack.c.b16 %v495, %v492
      %v568 = vunpack.c.l.b16 %v408
      %v569 = vunpack.c.l.b16 %v409
      %v570 = vunpack.c.l.b16 %v410
      %v571 = vunpack.c.l.b16 %v411
      %v572 = vunpack.c.l.b16 %v412
      %v573 = vunpack.c.l.b16 %v413
      %v574 = vunpack.c.l.b16 %v414
      %v575 = vunpack.c.l.b16 %v415
      %v576 = vunpack.c.l.b16 %v416
      %v577 = vunpack.c.l.b16 %v417
      %v578 = vunpack.c.l.b16 %v418
      %v579 = vunpack.c.l.b16 %v419
      %v580 = vunpack.c.l.b16 %v420
      %v581 = vunpack.c.l.b16 %v421
      %v582 = vunpack.c.l.b16 %v422
      %v583 = vunpack.c.l.b16 %v423
      %v584 = vunpack.c.l.b16 %v424
      %v585 = vunpack.c.l.b16 %v425
      %v586 = vunpack.c.l.b16 %v426
      %v587 = vunpack.c.l.b16 %v427
      %v588 = vunpack.c.l.b16 %v428
      %v589 = vunpack.c.l.b16 %v429
      %v590 = vunpack.c.l.b16 %v430
      %v591 = vunpack.c.l.b16 %v431
      %v592 = vunpack.c.l.b16 %v432
      %v593 = vunpack.c.l.b16 %v433
      %v594 = vunpack.c.l.b16 %v434
      %v595 = vunpack.c.l.b16 %v435
      %v596 = vunpack.c.l.b16 %v436
      %v597 = vunpack.c.l.b16 %v437
      %v598 = vunpack.c.l.b16 %v438
      %v599 = vunpack.c.l.b16 %v439
      %v600 = vunpack.c.l.b16 %v440
      %v601 = vunpack.c.l.b16 %v441
      %v602 = vunpack.c.l.b16 %v442
      %v603 = vunpack.c.l.b16 %v443
      %v604 = vunpack.c.l.b16 %v444
      %v605 = vunpack.c.l.b16 %v445
      %v606 = vunpack.c.l.b16 %v446
      %v607 = vunpack.c.l.b16 %v447
      %v608 = vunpack.c.l.b16 %v448
      %v609 = vunpack.c.l.b16 %v449
      %v610 = vunpack.c.l.b16 %v450
      %v611 = vunpack.c.l.b16 %v451
      %v612 = vunpack.c.l.b16 %v452
      %v613 = vunpack.c.l.b16 %v453
      %v614 = vunpack.c.l.b16 %v454
      %v615 = vunpack.c.l.b16 %v455
      %v616 = vpack.c.b16 %v569, %v568
      %v617 = vpack.c.b16 %v571, %v570
      %v618 = vpack.c.b16 %v573, %v572
      %v619 = vpack.c.b16 %v575, %v574
      %v620 = vpack.c.b16 %v577, %v576
      %v621 = vpack.c.b16 %v579, %v578
      %v622 = vpack.c.b16 %v581, %v580
      %v623 = vpack.c.b16 %v583, %v582
      %v624 = vpack.c.b16 %v585, %v584
      %v625 = vpack.c.b16 %v587, %v586
      %v626 = vpack.c.b16 %v589, %v588
      %v627 = vpack.c.b16 %v591, %v590
      %v628 = vpack.c.b16 %v593, %v592
      %v629 = vpack.c.b16 %v595, %v594
      %v630 = vpack.c.b16 %v597, %v596
      %v631 = vpack.c.b16 %v599, %v598
      %v632 = vpack.c.b16 %v601, %v600
      %v633 = vpack.c.b16 %v603, %v602
      %v634 = vpack.c.b16 %v605, %v604
      %v635 = vpack.c.b16 %v607, %v606
      %v636 = vpack.c.b16 %v609, %v608
      %v637 = vpack.c.b16 %v611, %v610
      %v638 = vpack.c.b16 %v613, %v612
      %v639 = vpack.c.b16 %v615, %v614
      %664 = vmatprep.subr.bf16.mxu0 0
      %665 = vmatpush1.bf16.msra.mxu0 %v623
      %666 = vmatprep.subr.bf16.mxu0 0
      %667 = vmatpush1.bf16.msra.mxu0 %v622
      %668 = vmatprep.subr.bf16.mxu0 0
      %669 = vmatpush1.bf16.msra.mxu0 %v621
      %670 = vmatprep.subr.bf16.mxu0 0
      %671 = vmatpush1.bf16.msra.mxu0 %v620
      %672 = vmatprep.subr.bf16.mxu0 0
      %673 = vmatpush1.bf16.msra.mxu0 %v619
      %674 = vmatprep.subr.bf16.mxu0 0
      %675 = vmatpush1.bf16.msra.mxu0 %v618
      %676 = vmatprep.subr.bf16.mxu0 0
      %677 = vmatpush1.bf16.msra.mxu0 %v617
      %678 = vmatprep.subr.bf16.mxu0 0
      %679 = vmatpush1.bf16.msra.mxu0 %v616
      %680 = vmatprep.subr.bf16.mxu0 0
      %681 = vmatpush2.bf16.msra.mxu0 %v631
      %682 = vmatprep.subr.bf16.mxu0 0
      %683 = vmatpush2.bf16.msra.mxu0 %v630
      %684 = vmatprep.subr.bf16.mxu0 0
      %685 = vmatpush2.bf16.msra.mxu0 %v629
      %686 = vmatprep.subr.bf16.mxu0 0
      %687 = vmatpush2.bf16.msra.mxu0 %v628
      %688 = vmatprep.subr.bf16.mxu0 0
      %689 = vmatpush2.bf16.msra.mxu0 %v627
      %690 = vmatprep.subr.bf16.mxu0 0
      %691 = vmatpush2.bf16.msra.mxu0 %v626
      %692 = vmatprep.subr.bf16.mxu0 0
      %693 = vmatpush2.bf16.msra.mxu0 %v625
      %694 = vmatprep.subr.bf16.mxu0 0
      %695 = vmatpush2.bf16.msra.mxu0 %v624
      %696 = vmatprep.mubr.bf16.mxu0 %v497
      %697 = vmatmul.mubr.bf16.gmra.mxu0 %v496
      %v698 = vpop.f32.mrf.mxu0
      %v699 = vadd.f32 0.0, %v698
      %v700 = vpop.f32.mrf.mxu0
      %v701 = vpop.f32.mrf.mxu0
      %v702 = vadd.f32 0.0, %v701
      %v703 = vpop.f32.mrf.mxu0
      %704 = vmatprep.mubr.bf16.mxu0 %v500
      %705 = vmatmul.mubr.bf16.gmra.mxu0 %v499
      %v706 = vpop.f32.mrf.mxu0
      %v707 = vadd.f32 0.0, %v706
      %v708 = vpop.f32.mrf.mxu0
      %v709 = vpop.f32.mrf.mxu0
      %v710 = vadd.f32 0.0, %v709
      %v711 = vpop.f32.mrf.mxu0
      %712 = vmatprep.mubr.bf16.mxu0 %v503
      %713 = vmatmul.mubr.bf16.gmra.mxu0 %v502
      %v714 = vpop.f32.mrf.mxu0
      %v715 = vadd.f32 0.0, %v714
      %v716 = vpop.f32.mrf.mxu0
      %v717 = vpop.f32.mrf.mxu0
      %v718 = vadd.f32 0.0, %v717
      %v719 = vpop.f32.mrf.mxu0
      %720 = vmatprep.mubr.bf16.mxu0 %v506
      %721 = vmatmul.mubr.bf16.gmra.mxu0 %v505
      %v722 = vpop.f32.mrf.mxu0
      %v723 = vadd.f32 0.0, %v722
      %v724 = vpop.f32.mrf.mxu0
      %v725 = vpop.f32.mrf.mxu0
      %v726 = vadd.f32 0.0, %v725
      %v727 = vpop.f32.mrf.mxu0
      %728 = vdwg.mxu0
      %729 = vmatprep.subr.bf16.mxu0 0
      %730 = vmatpush1.bf16.msra.mxu0 %v639
      %731 = vmatprep.subr.bf16.mxu0 0
      %732 = vmatpush1.bf16.msra.mxu0 %v638
      %733 = vmatprep.subr.bf16.mxu0 0
      %734 = vmatpush1.bf16.msra.mxu0 %v637
      %735 = vmatprep.subr.bf16.mxu0 0
      %736 = vmatpush1.bf16.msra.mxu0 %v636
      %737 = vmatprep.subr.bf16.mxu0 0
      %738 = vmatpush1.bf16.msra.mxu0 %v635
      %739 = vmatprep.subr.bf16.mxu0 0
      %740 = vmatpush1.bf16.msra.mxu0 %v634
      %741 = vmatprep.subr.bf16.mxu0 0
      %742 = vmatpush1.bf16.msra.mxu0 %v633
      %743 = vmatprep.subr.bf16.mxu0 0
      %744 = vmatpush1.bf16.msra.mxu0 %v632
      %745 = vmatprep.subr.bf16.mxu0 0
      %746 = vmatpush2.bf16.msra.mxu0 0
      %747 = vmatprep.subr.bf16.mxu0 0
      %748 = vmatpush2.bf16.msra.mxu0 0
      %749 = vmatprep.subr.bf16.mxu0 0
      %750 = vmatpush2.bf16.msra.mxu0 0
      %751 = vmatprep.subr.bf16.mxu0 0
      %752 = vmatpush2.bf16.msra.mxu0 0
      %753 = vmatprep.subr.bf16.mxu0 0
      %754 = vmatpush2.bf16.msra.mxu0 0
      %755 = vmatprep.subr.bf16.mxu0 0
      %756 = vmatpush2.bf16.msra.mxu0 0
      %757 = vmatprep.subr.bf16.mxu0 0
      %758 = vmatpush2.bf16.msra.mxu0 0
      %759 = vmatprep.subr.bf16.mxu0 0
      %760 = vmatpush2.bf16.msra.mxu0 0
      %761 = vmatprep.mubr.bf16.mxu0 0
      %762 = vmatmul.mubr.bf16.gmra.mxu0 %v498
      %v763 = vpop.f32.mrf.mxu0
      %v764 = vadd.f32 %v699, %v763
      %v765 = vpop.f32.mrf.mxu0
      %v766 = vpop.f32.mrf.mxu0
      %v767 = vadd.f32 %v702, %v766
      %v768 = vpop.f32.mrf.mxu0
      %769 = vmatprep.mubr.bf16.mxu0 0
      %770 = vmatmul.mubr.bf16.gmra.mxu0 %v501
      %v771 = vpop.f32.mrf.mxu0
      %v772 = vadd.f32 %v707, %v771
      %v773 = vpop.f32.mrf.mxu0
      %v774 = vpop.f32.mrf.mxu0
      %v775 = vadd.f32 %v710, %v774
      %v776 = vpop.f32.mrf.mxu0
      %777 = vmatprep.mubr.bf16.mxu0 0
      %778 = vmatmul.mubr.bf16.gmra.mxu0 %v504
      %v779 = vpop.f32.mrf.mxu0
      %v780 = vadd.f32 %v715, %v779
      %v781 = vpop.f32.mrf.mxu0
      %v782 = vpop.f32.mrf.mxu0
      %v783 = vadd.f32 %v718, %v782
      %v784 = vpop.f32.mrf.mxu0
      %785 = vmatprep.mubr.bf16.mxu0 0
      %786 = vmatmul.mubr.bf16.gmra.mxu0 %v507
      %v787 = vpop.f32.mrf.mxu0
      %v788 = vadd.f32 %v723, %v787
      %v789 = vpop.f32.mrf.mxu0
      %v790 = vpop.f32.mrf.mxu0
      %v791 = vadd.f32 %v726, %v790
      %v792 = vpop.f32.mrf.mxu0
      %793 = vdwg.mxu0
      %v810 = vunpack.c.l.b16 %v326
      %v811 = vunpack.c.h.b16 %v326
      %v812 = vunpack.c.l.b16 %v327
      %v813 = vunpack.c.l.b16 %v328
      %v814 = vunpack.c.h.b16 %v328
      %v815 = vunpack.c.l.b16 %v329
      %v816 = vunpack.c.l.b16 %v330
      %v817 = vunpack.c.h.b16 %v330
      %v818 = vunpack.c.l.b16 %v331
      %v819 = vunpack.c.l.b16 %v332
      %v820 = vunpack.c.h.b16 %v332
      %v821 = vunpack.c.l.b16 %v333
      %v822 = vunpack.c.l.b16 %v334
      %v823 = vunpack.c.h.b16 %v334
      %v824 = vunpack.c.l.b16 %v335
      %v825 = vunpack.c.l.b16 %v336
      %v826 = vunpack.c.h.b16 %v336
      %v827 = vunpack.c.l.b16 %v337
      %v828 = vunpack.c.l.b16 %v338
      %v829 = vunpack.c.h.b16 %v338
      %v830 = vunpack.c.l.b16 %v339
      %v831 = vunpack.c.l.b16 %v340
      %v832 = vunpack.c.h.b16 %v340
      %v833 = vunpack.c.l.b16 %v341
      %v834 = vpack.c.b16 %v813, %v810
      %v835 = vpack.c.b16 %v814, %v811
      %v836 = vpack.c.b16 %v815, %v812
      %v837 = vpack.c.b16 %v819, %v816
      %v838 = vpack.c.b16 %v820, %v817
      %v839 = vpack.c.b16 %v821, %v818
      %v840 = vpack.c.b16 %v825, %v822
      %v841 = vpack.c.b16 %v826, %v823
      %v842 = vpack.c.b16 %v827, %v824
      %v843 = vpack.c.b16 %v831, %v828
      %v844 = vpack.c.b16 %v832, %v829
      %v845 = vpack.c.b16 %v833, %v830
      %v906 = vunpack.c.l.b16 %v342
      %v907 = vunpack.c.l.b16 %v343
      %v908 = vunpack.c.l.b16 %v344
      %v909 = vunpack.c.l.b16 %v345
      %v910 = vunpack.c.l.b16 %v346
      %v911 = vunpack.c.l.b16 %v347
      %v912 = vunpack.c.l.b16 %v348
      %v913 = vunpack.c.l.b16 %v349
      %v914 = vunpack.c.l.b16 %v350
      %v915 = vunpack.c.l.b16 %v351
      %v916 = vunpack.c.l.b16 %v352
      %v917 = vunpack.c.l.b16 %v353
      %v918 = vunpack.c.l.b16 %v354
      %v919 = vunpack.c.l.b16 %v355
      %v920 = vunpack.c.l.b16 %v356
      %v921 = vunpack.c.l.b16 %v357
      %v922 = vunpack.c.l.b16 %v358
      %v923 = vunpack.c.l.b16 %v359
      %v924 = vunpack.c.l.b16 %v360
      %v925 = vunpack.c.l.b16 %v361
      %v926 = vunpack.c.l.b16 %v362
      %v927 = vunpack.c.l.b16 %v363
      %v928 = vunpack.c.l.b16 %v364
      %v929 = vunpack.c.l.b16 %v365
      %v930 = vunpack.c.l.b16 %v366
      %v931 = vunpack.c.l.b16 %v367
      %v932 = vunpack.c.l.b16 %v368
      %v933 = vunpack.c.l.b16 %v369
      %v934 = vunpack.c.l.b16 %v370
      %v935 = vunpack.c.l.b16 %v371
      %v936 = vunpack.c.l.b16 %v372
      %v937 = vunpack.c.l.b16 %v373
      %v938 = vunpack.c.l.b16 %v374
      %v939 = vunpack.c.l.b16 %v375
      %v940 = vunpack.c.l.b16 %v376
      %v941 = vunpack.c.l.b16 %v377
      %v942 = vunpack.c.l.b16 %v378
      %v943 = vunpack.c.l.b16 %v379
      %v944 = vunpack.c.l.b16 %v380
      %v945 = vunpack.c.l.b16 %v381
      %v946 = vunpack.c.l.b16 %v382
      %v947 = vunpack.c.l.b16 %v383
      %v948 = vunpack.c.l.b16 %v384
      %v949 = vunpack.c.l.b16 %v385
      %v950 = vunpack.c.l.b16 %v386
      %v951 = vunpack.c.l.b16 %v387
      %v952 = vunpack.c.l.b16 %v388
      %v953 = vunpack.c.l.b16 %v389
      %v954 = vpack.c.b16 %v907, %v906
      %v955 = vpack.c.b16 %v909, %v908
      %v956 = vpack.c.b16 %v911, %v910
      %v957 = vpack.c.b16 %v913, %v912
      %v958 = vpack.c.b16 %v915, %v914
      %v959 = vpack.c.b16 %v917, %v916
      %v960 = vpack.c.b16 %v919, %v918
      %v961 = vpack.c.b16 %v921, %v920
      %v962 = vpack.c.b16 %v923, %v922
      %v963 = vpack.c.b16 %v925, %v924
      %v964 = vpack.c.b16 %v927, %v926
      %v965 = vpack.c.b16 %v929, %v928
      %v966 = vpack.c.b16 %v931, %v930
      %v967 = vpack.c.b16 %v933, %v932
      %v968 = vpack.c.b16 %v935, %v934
      %v969 = vpack.c.b16 %v937, %v936
      %v970 = vpack.c.b16 %v939, %v938
      %v971 = vpack.c.b16 %v941, %v940
      %v972 = vpack.c.b16 %v943, %v942
      %v973 = vpack.c.b16 %v945, %v944
      %v974 = vpack.c.b16 %v947, %v946
      %v975 = vpack.c.b16 %v949, %v948
      %v976 = vpack.c.b16 %v951, %v950
      %v977 = vpack.c.b16 %v953, %v952
      %1002 = vmatprep.subr.bf16.mxu0 0
      %1003 = vmatpush1.bf16.msra.mxu0 %v961
      %1004 = vmatprep.subr.bf16.mxu0 0
      %1005 = vmatpush1.bf16.msra.mxu0 %v960
      %1006 = vmatprep.subr.bf16.mxu0 0
      %1007 = vmatpush1.bf16.msra.mxu0 %v959
      %1008 = vmatprep.subr.bf16.mxu0 0
      %1009 = vmatpush1.bf16.msra.mxu0 %v958
      %1010 = vmatprep.subr.bf16.mxu0 0
      %1011 = vmatpush1.bf16.msra.mxu0 %v957
      %1012 = vmatprep.subr.bf16.mxu0 0
      %1013 = vmatpush1.bf16.msra.mxu0 %v956
      %1014 = vmatprep.subr.bf16.mxu0 0
      %1015 = vmatpush1.bf16.msra.mxu0 %v955
      %1016 = vmatprep.subr.bf16.mxu0 0
      %1017 = vmatpush1.bf16.msra.mxu0 %v954
      %1018 = vmatprep.subr.bf16.mxu0 0
      %1019 = vmatpush2.bf16.msra.mxu0 %v969
      %1020 = vmatprep.subr.bf16.mxu0 0
      %1021 = vmatpush2.bf16.msra.mxu0 %v968
      %1022 = vmatprep.subr.bf16.mxu0 0
      %1023 = vmatpush2.bf16.msra.mxu0 %v967
      %1024 = vmatprep.subr.bf16.mxu0 0
      %1025 = vmatpush2.bf16.msra.mxu0 %v966
      %1026 = vmatprep.subr.bf16.mxu0 0
      %1027 = vmatpush2.bf16.msra.mxu0 %v965
      %1028 = vmatprep.subr.bf16.mxu0 0
      %1029 = vmatpush2.bf16.msra.mxu0 %v964
      %1030 = vmatprep.subr.bf16.mxu0 0
      %1031 = vmatpush2.bf16.msra.mxu0 %v963
      %1032 = vmatprep.subr.bf16.mxu0 0
      %1033 = vmatpush2.bf16.msra.mxu0 %v962
      %1034 = vmatprep.mubr.bf16.mxu0 %v835
      %1035 = vmatmul.mubr.bf16.gmra.mxu0 %v834
      %v1036 = vpop.f32.mrf.mxu0
      %v1037 = vadd.f32 %v764, %v1036
      %v1038 = vpop.f32.mrf.mxu0
      %v1039 = vpop.f32.mrf.mxu0
      %v1040 = vadd.f32 %v767, %v1039
      %v1041 = vpop.f32.mrf.mxu0
      %1042 = vmatprep.mubr.bf16.mxu0 %v838
      %1043 = vmatmul.mubr.bf16.gmra.mxu0 %v837
      %v1044 = vpop.f32.mrf.mxu0
      %v1045 = vadd.f32 %v772, %v1044
      %v1046 = vpop.f32.mrf.mxu0
      %v1047 = vpop.f32.mrf.mxu0
      %v1048 = vadd.f32 %v775, %v1047
      %v1049 = vpop.f32.mrf.mxu0
      %1050 = vmatprep.mubr.bf16.mxu0 %v841
      %1051 = vmatmul.mubr.bf16.gmra.mxu0 %v840
      %v1052 = vpop.f32.mrf.mxu0
      %v1053 = vadd.f32 %v780, %v1052
      %v1054 = vpop.f32.mrf.mxu0
      %v1055 = vpop.f32.mrf.mxu0
      %v1056 = vadd.f32 %v783, %v1055
      %v1057 = vpop.f32.mrf.mxu0
      %1058 = vmatprep.mubr.bf16.mxu0 %v844
      %1059 = vmatmul.mubr.bf16.gmra.mxu0 %v843
      %v1060 = vpop.f32.mrf.mxu0
      %v1061 = vadd.f32 %v788, %v1060
      %v1062 = vpop.f32.mrf.mxu0
      %v1063 = vpop.f32.mrf.mxu0
      %v1064 = vadd.f32 %v791, %v1063
      %v1065 = vpop.f32.mrf.mxu0
      %1066 = vdwg.mxu0
      %1067 = vmatprep.subr.bf16.mxu0 0
      %1068 = vmatpush1.bf16.msra.mxu0 %v977
      %1069 = vmatprep.subr.bf16.mxu0 0
      %1070 = vmatpush1.bf16.msra.mxu0 %v976
      %1071 = vmatprep.subr.bf16.mxu0 0
      %1072 = vmatpush1.bf16.msra.mxu0 %v975
      %1073 = vmatprep.subr.bf16.mxu0 0
      %1074 = vmatpush1.bf16.msra.mxu0 %v974
      %1075 = vmatprep.subr.bf16.mxu0 0
      %1076 = vmatpush1.bf16.msra.mxu0 %v973
      %1077 = vmatprep.subr.bf16.mxu0 0
      %1078 = vmatpush1.bf16.msra.mxu0 %v972
      %1079 = vmatprep.subr.bf16.mxu0 0
      %1080 = vmatpush1.bf16.msra.mxu0 %v971
      %1081 = vmatprep.subr.bf16.mxu0 0
      %1082 = vmatpush1.bf16.msra.mxu0 %v970
      %1083 = vmatprep.subr.bf16.mxu0 0
      %1084 = vmatpush2.bf16.msra.mxu0 0
      %1085 = vmatprep.subr.bf16.mxu0 0
      %1086 = vmatpush2.bf16.msra.mxu0 0
      %1087 = vmatprep.subr.bf16.mxu0 0
      %1088 = vmatpush2.bf16.msra.mxu0 0
      %1089 = vmatprep.subr.bf16.mxu0 0
      %1090 = vmatpush2.bf16.msra.mxu0 0
      %1091 = vmatprep.subr.bf16.mxu0 0
      %1092 = vmatpush2.bf16.msra.mxu0 0
      %1093 = vmatprep.subr.bf16.mxu0 0
      %1094 = vmatpush2.bf16.msra.mxu0 0
      %1095 = vmatprep.subr.bf16.mxu0 0
      %1096 = vmatpush2.bf16.msra.mxu0 0
      %1097 = vmatprep.subr.bf16.mxu0 0
      %1098 = vmatpush2.bf16.msra.mxu0 0
      %1099 = vmatprep.mubr.bf16.mxu0 0
      %1100 = vmatmul.mubr.bf16.gmra.mxu0 %v836
      %v1101 = vpop.f32.mrf.mxu0
      %v1102 = vadd.f32 %v1037, %v1101
      %v1103 = vpop.f32.mrf.mxu0
      %v1104 = vpop.f32.mrf.mxu0
      %v1105 = vadd.f32 %v1040, %v1104
      %v1106 = vpop.f32.mrf.mxu0
      %1107 = vmatprep.mubr.bf16.mxu0 0
      %1108 = vmatmul.mubr.bf16.gmra.mxu0 %v839
      %v1109 = vpop.f32.mrf.mxu0
      %v1110 = vadd.f32 %v1045, %v1109
      %v1111 = vpop.f32.mrf.mxu0
      %v1112 = vpop.f32.mrf.mxu0
      %v1113 = vadd.f32 %v1048, %v1112
      %v1114 = vpop.f32.mrf.mxu0
      %1115 = vmatprep.mubr.bf16.mxu0 0
      %1116 = vmatmul.mubr.bf16.gmra.mxu0 %v842
      %v1117 = vpop.f32.mrf.mxu0
      %v1118 = vadd.f32 %v1053, %v1117
      %v1119 = vpop.f32.mrf.mxu0
      %v1120 = vpop.f32.mrf.mxu0
      %v1121 = vadd.f32 %v1056, %v1120
      %v1122 = vpop.f32.mrf.mxu0
      %1123 = vmatprep.mubr.bf16.mxu0 0
      %1124 = vmatmul.mubr.bf16.gmra.mxu0 %v845
      %v1125 = vpop.f32.mrf.mxu0
      %v1126 = vadd.f32 %v1061, %v1125
      %v1127 = vpop.f32.mrf.mxu0
      %v1128 = vpop.f32.mrf.mxu0
      %v1129 = vadd.f32 %v1064, %v1128
      %v1130 = vpop.f32.mrf.mxu0
      %1131 = vdwg.mxu0
      %v1132 = vld [vmem:[%s293 + $0xc] sm:$0xff]
      %v1133 = vld [vmem:[%s293 + $0x14] sm:$0xf]
      %v1134 = vld [vmem:[%s293 + $0x18] sm:$0xff]
      %v1135 = vld [vmem:[%s293 + $0x20] sm:$0xf]
      %v1136 = vld [vmem:[%s293 + $0x24] sm:$0xff]
      %v1137 = vld [vmem:[%s293 + $0x2c] sm:$0xf]
      %v1138 = vld [vmem:[%s293 + $0x30] sm:$0xff]
      %v1139 = vld [vmem:[%s293 + $0x38] sm:$0xf]
      %v1140 = vld [vmem:[%s293 + $0x3c] sm:$0xff]
      %v1141 = vld [vmem:[%s293 + $0x44] sm:$0xf]
      %v1142 = vld [vmem:[%s293 + $0x48] sm:$0xff]
      %v1143 = vld [vmem:[%s293 + $0x50] sm:$0xf]
      %v1144 = vld [vmem:[%s293 + $0x54] sm:$0xff]
      %v1145 = vld [vmem:[%s293 + $0x5c] sm:$0xf]
      %v1146 = vld [vmem:[%s293 + $0x60] sm:$0xff]
      %v1147 = vld [vmem:[%s293 + $0x68] sm:$0xf]
      %s1148 = scalar_lea.vmem %s297, 384
      %v1149 = vld [vmem:[%s1148] sm:$0xf]
      %v1150 = vld [vmem:[%s1148 + $0x4] sm:$0xf]
      %v1151 = vld [vmem:[%s1148 + $0x8] sm:$0xf]
      %v1152 = vld [vmem:[%s1148 + $0xc] sm:$0xf]
      %v1153 = vld [vmem:[%s1148 + $0x10] sm:$0xf]
      %v1154 = vld [vmem:[%s1148 + $0x14] sm:$0xf]
      %v1155 = vld [vmem:[%s1148 + $0x18] sm:$0xf]
      %v1156 = vld [vmem:[%s1148 + $0x1c] sm:$0xf]
      %v1157 = vld [vmem:[%s1148 + $0x20] sm:$0xf]
      %v1158 = vld [vmem:[%s1148 + $0x24] sm:$0xf]
      %v1159 = vld [vmem:[%s1148 + $0x28] sm:$0xf]
      %v1160 = vld [vmem:[%s1148 + $0x2c] sm:$0xf]
      %v1161 = vld [vmem:[%s1148 + $0x30] sm:$0xf]
      %v1162 = vld [vmem:[%s1148 + $0x34] sm:$0xf]
      %v1163 = vld [vmem:[%s1148 + $0x38] sm:$0xf]
      %v1164 = vld [vmem:[%s1148 + $0x3c] sm:$0xf]
      %v1165 = vld [vmem:[%s1148 + $0x40] sm:$0xf]
      %v1166 = vld [vmem:[%s1148 + $0x44] sm:$0xf]
      %v1167 = vld [vmem:[%s1148 + $0x48] sm:$0xf]
      %v1168 = vld [vmem:[%s1148 + $0x4c] sm:$0xf]
      %v1169 = vld [vmem:[%s1148 + $0x50] sm:$0xf]
      %v1170 = vld [vmem:[%s1148 + $0x54] sm:$0xf]
      %v1171 = vld [vmem:[%s1148 + $0x58] sm:$0xf]
      %v1172 = vld [vmem:[%s1148 + $0x5c] sm:$0xf]
      %v1173 = vld [vmem:[%s1148 + $0x60] sm:$0xf]
      %v1174 = vld [vmem:[%s1148 + $0x64] sm:$0xf]
      %v1175 = vld [vmem:[%s1148 + $0x68] sm:$0xf]
      %v1176 = vld [vmem:[%s1148 + $0x6c] sm:$0xf]
      %v1177 = vld [vmem:[%s1148 + $0x70] sm:$0xf]
      %v1178 = vld [vmem:[%s1148 + $0x74] sm:$0xf]
      %v1179 = vld [vmem:[%s1148 + $0x78] sm:$0xf]
      %v1180 = vld [vmem:[%s1148 + $0x7c] sm:$0xf]
      %v1181 = vld [vmem:[%s1148 + $0x80] sm:$0xf]
      %v1182 = vld [vmem:[%s1148 + $0x84] sm:$0xf]
      %v1183 = vld [vmem:[%s1148 + $0x88] sm:$0xf]
      %v1184 = vld [vmem:[%s1148 + $0x8c] sm:$0xf]
      %v1185 = vld [vmem:[%s1148 + $0x90] sm:$0xf]
      %v1186 = vld [vmem:[%s1148 + $0x94] sm:$0xf]
      %v1187 = vld [vmem:[%s1148 + $0x98] sm:$0xf]
      %v1188 = vld [vmem:[%s1148 + $0x9c] sm:$0xf]
      %v1189 = vld [vmem:[%s1148 + $0xa0] sm:$0xf]
      %v1190 = vld [vmem:[%s1148 + $0xa4] sm:$0xf]
      %v1191 = vld [vmem:[%s1148 + $0xa8] sm:$0xf]
      %v1192 = vld [vmem:[%s1148 + $0xac] sm:$0xf]
      %v1193 = vld [vmem:[%s1148 + $0xb0] sm:$0xf]
      %v1194 = vld [vmem:[%s1148 + $0xb4] sm:$0xf]
      %v1195 = vld [vmem:[%s1148 + $0xb8] sm:$0xf]
      %v1196 = vld [vmem:[%s1148 + $0xbc] sm:$0xf]
      %v1213 = vunpack.c.l.b16 %v1132
      %v1214 = vunpack.c.h.b16 %v1132
      %v1215 = vunpack.c.l.b16 %v1133
      %v1216 = vunpack.c.l.b16 %v1134
      %v1217 = vunpack.c.h.b16 %v1134
      %v1218 = vunpack.c.l.b16 %v1135
      %v1219 = vunpack.c.l.b16 %v1136
      %v1220 = vunpack.c.h.b16 %v1136
      %v1221 = vunpack.c.l.b16 %v1137
      %v1222 = vunpack.c.l.b16 %v1138
      %v1223 = vunpack.c.h.b16 %v1138
      %v1224 = vunpack.c.l.b16 %v1139
      %v1225 = vunpack.c.l.b16 %v1140
      %v1226 = vunpack.c.h.b16 %v1140
      %v1227 = vunpack.c.l.b16 %v1141
      %v1228 = vunpack.c.l.b16 %v1142
      %v1229 = vunpack.c.h.b16 %v1142
      %v1230 = vunpack.c.l.b16 %v1143
      %v1231 = vunpack.c.l.b16 %v1144
      %v1232 = vunpack.c.h.b16 %v1144
      %v1233 = vunpack.c.l.b16 %v1145
      %v1234 = vunpack.c.l.b16 %v1146
      %v1235 = vunpack.c.h.b16 %v1146
      %v1236 = vunpack.c.l.b16 %v1147
      %v1237 = vpack.c.b16 %v1216, %v1213
      %v1238 = vpack.c.b16 %v1217, %v1214
      %v1239 = vpack.c.b16 %v1218, %v1215
      %v1240 = vpack.c.b16 %v1222, %v1219
      %v1241 = vpack.c.b16 %v1223, %v1220
      %v1242 = vpack.c.b16 %v1224, %v1221
      %v1243 = vpack.c.b16 %v1228, %v1225
      %v1244 = vpack.c.b16 %v1229, %v1226
      %v1245 = vpack.c.b16 %v1230, %v1227
      %v1246 = vpack.c.b16 %v1234, %v1231
      %v1247 = vpack.c.b16 %v1235, %v1232
      %v1248 = vpack.c.b16 %v1236, %v1233
      %v1309 = vunpack.c.l.b16 %v1149
      %v1310 = vunpack.c.l.b16 %v1150
      %v1311 = vunpack.c.l.b16 %v1151
      %v1312 = vunpack.c.l.b16 %v1152
      %v1313 = vunpack.c.l.b16 %v1153
      %v1314 = vunpack.c.l.b16 %v1154
      %v1315 = vunpack.c.l.b16 %v1155
      %v1316 = vunpack.c.l.b16 %v1156
      %v1317 = vunpack.c.l.b16 %v1157
      %v1318 = vunpack.c.l.b16 %v1158
      %v1319 = vunpack.c.l.b16 %v1159
      %v1320 = vunpack.c.l.b16 %v1160
      %v1321 = vunpack.c.l.b16 %v1161
      %v1322 = vunpack.c.l.b16 %v1162
      %v1323 = vunpack.c.l.b16 %v1163
      %v1324 = vunpack.c.l.b16 %v1164
      %v1325 = vunpack.c.l.b16 %v1165
      %v1326 = vunpack.c.l.b16 %v1166
      %v1327 = vunpack.c.l.b16 %v1167
      %v1328 = vunpack.c.l.b16 %v1168
      %v1329 = vunpack.c.l.b16 %v1169
      %v1330 = vunpack.c.l.b16 %v1170
      %v1331 = vunpack.c.l.b16 %v1171
      %v1332 = vunpack.c.l.b16 %v1172
      %v1333 = vunpack.c.l.b16 %v1173
      %v1334 = vunpack.c.l.b16 %v1174
      %v1335 = vunpack.c.l.b16 %v1175
      %v1336 = vunpack.c.l.b16 %v1176
      %v1337 = vunpack.c.l.b16 %v1177
      %v1338 = vunpack.c.l.b16 %v1178
      %v1339 = vunpack.c.l.b16 %v1179
      %v1340 = vunpack.c.l.b16 %v1180
      %v1341 = vunpack.c.l.b16 %v1181
      %v1342 = vunpack.c.l.b16 %v1182
      %v1343 = vunpack.c.l.b16 %v1183
      %v1344 = vunpack.c.l.b16 %v1184
      %v1345 = vunpack.c.l.b16 %v1185
      %v1346 = vunpack.c.l.b16 %v1186
      %v1347 = vunpack.c.l.b16 %v1187
      %v1348 = vunpack.c.l.b16 %v1188
      %v1349 = vunpack.c.l.b16 %v1189
      %v1350 = vunpack.c.l.b16 %v1190
      %v1351 = vunpack.c.l.b16 %v1191
      %v1352 = vunpack.c.l.b16 %v1192
      %v1353 = vunpack.c.l.b16 %v1193
      %v1354 = vunpack.c.l.b16 %v1194
      %v1355 = vunpack.c.l.b16 %v1195
      %v1356 = vunpack.c.l.b16 %v1196
      %v1357 = vpack.c.b16 %v1310, %v1309
      %v1358 = vpack.c.b16 %v1312, %v1311
      %v1359 = vpack.c.b16 %v1314, %v1313
      %v1360 = vpack.c.b16 %v1316, %v1315
      %v1361 = vpack.c.b16 %v1318, %v1317
      %v1362 = vpack.c.b16 %v1320, %v1319
      %v1363 = vpack.c.b16 %v1322, %v1321
      %v1364 = vpack.c.b16 %v1324, %v1323
      %v1365 = vpack.c.b16 %v1326, %v1325
      %v1366 = vpack.c.b16 %v1328, %v1327
      %v1367 = vpack.c.b16 %v1330, %v1329
      %v1368 = vpack.c.b16 %v1332, %v1331
      %v1369 = vpack.c.b16 %v1334, %v1333
      %v1370 = vpack.c.b16 %v1336, %v1335
      %v1371 = vpack.c.b16 %v1338, %v1337
      %v1372 = vpack.c.b16 %v1340, %v1339
      %v1373 = vpack.c.b16 %v1342, %v1341
      %v1374 = vpack.c.b16 %v1344, %v1343
      %v1375 = vpack.c.b16 %v1346, %v1345
      %v1376 = vpack.c.b16 %v1348, %v1347
      %v1377 = vpack.c.b16 %v1350, %v1349
      %v1378 = vpack.c.b16 %v1352, %v1351
      %v1379 = vpack.c.b16 %v1354, %v1353
      %v1380 = vpack.c.b16 %v1356, %v1355
      %1405 = vmatprep.subr.bf16.mxu0 0
      %1406 = vmatpush1.bf16.msra.mxu0 %v1364
      %1407 = vmatprep.subr.bf16.mxu0 0
      %1408 = vmatpush1.bf16.msra.mxu0 %v1363
      %1409 = vmatprep.subr.bf16.mxu0 0
      %1410 = vmatpush1.bf16.msra.mxu0 %v1362
      %1411 = vmatprep.subr.bf16.mxu0 0
      %1412 = vmatpush1.bf16.msra.mxu0 %v1361
      %1413 = vmatprep.subr.bf16.mxu0 0
      %1414 = vmatpush1.bf16.msra.mxu0 %v1360
      %1415 = vmatprep.subr.bf16.mxu0 0
      %1416 = vmatpush1.bf16.msra.mxu0 %v1359
      %1417 = vmatprep.subr.bf16.mxu0 0
      %1418 = vmatpush1.bf16.msra.mxu0 %v1358
      %1419 = vmatprep.subr.bf16.mxu0 0
      %1420 = vmatpush1.bf16.msra.mxu0 %v1357
      %1421 = vmatprep.subr.bf16.mxu0 0
      %1422 = vmatpush2.bf16.msra.mxu0 %v1372
      %1423 = vmatprep.subr.bf16.mxu0 0
      %1424 = vmatpush2.bf16.msra.mxu0 %v1371
      %1425 = vmatprep.subr.bf16.mxu0 0
      %1426 = vmatpush2.bf16.msra.mxu0 %v1370
      %1427 = vmatprep.subr.bf16.mxu0 0
      %1428 = vmatpush2.bf16.msra.mxu0 %v1369
      %1429 = vmatprep.subr.bf16.mxu0 0
      %1430 = vmatpush2.bf16.msra.mxu0 %v1368
      %1431 = vmatprep.subr.bf16.mxu0 0
      %1432 = vmatpush2.bf16.msra.mxu0 %v1367
      %1433 = vmatprep.subr.bf16.mxu0 0
      %1434 = vmatpush2.bf16.msra.mxu0 %v1366
      %1435 = vmatprep.subr.bf16.mxu0 0
      %1436 = vmatpush2.bf16.msra.mxu0 %v1365
      %1437 = vmatprep.mubr.bf16.mxu0 %v1238
      %1438 = vmatmul.mubr.bf16.gmra.mxu0 %v1237
      %v1439 = vpop.f32.mrf.mxu0
      %v1440 = vadd.f32 0.0, %v1439
      %v1441 = vpop.f32.mrf.mxu0
      %v1442 = vpop.f32.mrf.mxu0
      %v1443 = vadd.f32 0.0, %v1442
      %v1444 = vpop.f32.mrf.mxu0
      %1445 = vmatprep.mubr.bf16.mxu0 %v1241
      %1446 = vmatmul.mubr.bf16.gmra.mxu0 %v1240
      %v1447 = vpop.f32.mrf.mxu0
      %v1448 = vadd.f32 0.0, %v1447
      %v1449 = vpop.f32.mrf.mxu0
      %v1450 = vpop.f32.mrf.mxu0
      %v1451 = vadd.f32 0.0, %v1450
      %v1452 = vpop.f32.mrf.mxu0
      %1453 = vmatprep.mubr.bf16.mxu0 %v1244
      %1454 = vmatmul.mubr.bf16.gmra.mxu0 %v1243
      %v1455 = vpop.f32.mrf.mxu0
      %v1456 = vadd.f32 0.0, %v1455
      %v1457 = vpop.f32.mrf.mxu0
      %v1458 = vpop.f32.mrf.mxu0
      %v1459 = vadd.f32 0.0, %v1458
      %v1460 = vpop.f32.mrf.mxu0
      %1461 = vmatprep.mubr.bf16.mxu0 %v1247
      %1462 = vmatmul.mubr.bf16.gmra.mxu0 %v1246
      %v1463 = vpop.f32.mrf.mxu0
      %v1464 = vadd.f32 0.0, %v1463
      %v1465 = vpop.f32.mrf.mxu0
      %v1466 = vpop.f32.mrf.mxu0
      %v1467 = vadd.f32 0.0, %v1466
      %v1468 = vpop.f32.mrf.mxu0
      %1469 = vdwg.mxu0
      %1470 = vmatprep.subr.bf16.mxu0 0
      %1471 = vmatpush1.bf16.msra.mxu0 %v1380
      %1472 = vmatprep.subr.bf16.mxu0 0
      %1473 = vmatpush1.bf16.msra.mxu0 %v1379
      %1474 = vmatprep.subr.bf16.mxu0 0
      %1475 = vmatpush1.bf16.msra.mxu0 %v1378
      %1476 = vmatprep.subr.bf16.mxu0 0
      %1477 = vmatpush1.bf16.msra.mxu0 %v1377
      %1478 = vmatprep.subr.bf16.mxu0 0
      %1479 = vmatpush1.bf16.msra.mxu0 %v1376
      %1480 = vmatprep.subr.bf16.mxu0 0
      %1481 = vmatpush1.bf16.msra.mxu0 %v1375
      %1482 = vmatprep.subr.bf16.mxu0 0
      %1483 = vmatpush1.bf16.msra.mxu0 %v1374
      %1484 = vmatprep.subr.bf16.mxu0 0
      %1485 = vmatpush1.bf16.msra.mxu0 %v1373
      %1486 = vmatprep.subr.bf16.mxu0 0
      %1487 = vmatpush2.bf16.msra.mxu0 0
      %1488 = vmatprep.subr.bf16.mxu0 0
      %1489 = vmatpush2.bf16.msra.mxu0 0
      %1490 = vmatprep.subr.bf16.mxu0 0
      %1491 = vmatpush2.bf16.msra.mxu0 0
      %1492 = vmatprep.subr.bf16.mxu0 0
      %1493 = vmatpush2.bf16.msra.mxu0 0
      %1494 = vmatprep.subr.bf16.mxu0 0
      %1495 = vmatpush2.bf16.msra.mxu0 0
      %1496 = vmatprep.subr.bf16.mxu0 0
      %1497 = vmatpush2.bf16.msra.mxu0 0
      %1498 = vmatprep.subr.bf16.mxu0 0
      %1499 = vmatpush2.bf16.msra.mxu0 0
      %1500 = vmatprep.subr.bf16.mxu0 0
      %1501 = vmatpush2.bf16.msra.mxu0 0
      %1502 = vmatprep.mubr.bf16.mxu0 0
      %1503 = vmatmul.mubr.bf16.gmra.mxu0 %v1239
      %v1504 = vpop.f32.mrf.mxu0
      %v1505 = vadd.f32 %v1440, %v1504
      %v1506 = vpop.f32.mrf.mxu0
      %v1507 = vpop.f32.mrf.mxu0
      %v1508 = vadd.f32 %v1443, %v1507
      %v1509 = vpop.f32.mrf.mxu0
      %1510 = vmatprep.mubr.bf16.mxu0 0
      %1511 = vmatmul.mubr.bf16.gmra.mxu0 %v1242
      %v1512 = vpop.f32.mrf.mxu0
      %v1513 = vadd.f32 %v1448, %v1512
      %v1514 = vpop.f32.mrf.mxu0
      %v1515 = vpop.f32.mrf.mxu0
      %v1516 = vadd.f32 %v1451, %v1515
      %v1517 = vpop.f32.mrf.mxu0
      %1518 = vmatprep.mubr.bf16.mxu0 0
      %1519 = vmatmul.mubr.bf16.gmra.mxu0 %v1245
      %v1520 = vpop.f32.mrf.mxu0
      %v1521 = vadd.f32 %v1456, %v1520
      %v1522 = vpop.f32.mrf.mxu0
      %v1523 = vpop.f32.mrf.mxu0
      %v1524 = vadd.f32 %v1459, %v1523
      %v1525 = vpop.f32.mrf.mxu0
      %1526 = vmatprep.mubr.bf16.mxu0 0
      %1527 = vmatmul.mubr.bf16.gmra.mxu0 %v1248
      %v1528 = vpop.f32.mrf.mxu0
      %v1529 = vadd.f32 %v1464, %v1528
      %v1530 = vpop.f32.mrf.mxu0
      %v1531 = vpop.f32.mrf.mxu0
      %v1532 = vadd.f32 %v1467, %v1531
      %v1533 = vpop.f32.mrf.mxu0
      %1534 = vdwg.mxu0
      %v1535 = vadd.f32 %v1102, %v1505
      %v1536 = vadd.f32 %v1105, %v1508
      %v1537 = vadd.f32 %v1110, %v1513
      %v1538 = vadd.f32 %v1113, %v1516
      %v1539 = vadd.f32 %v1118, %v1521
      %v1540 = vadd.f32 %v1121, %v1524
      %v1541 = vadd.f32 %v1126, %v1529
      %v1542 = vadd.f32 %v1129, %v1532
      %v1543 = vld [vmem:[%s300] sm:$0x1]
      %v1545 = vlaneseq
      %v1546 = vshrl.u32 %v1545, 7
      %v1547 = vsub.s32 0, %v1546
      %v1548 = vrot.slane %v1543, %v1547
      %v1550 = vadd.f32 %v1535, %v1548
      %v1551 = vadd.f32 %v1536, %v1548
      %v1552 = vadd.f32 %v1537, %v1548
      %v1553 = vadd.f32 %v1538, %v1548
      %v1554 = vadd.f32 %v1539, %v1548
      %v1555 = vadd.f32 %v1540, %v1548
      %v1556 = vadd.f32 %v1541, %v1548
      %v1557 = vadd.f32 %v1542, %v1548
      %v1558 = vld [vmem:[%s312] sm:$0xf]
      %v1559 = vld [vmem:[%s312 + $0x4] sm:$0xf]
      %v1560 = vld [vmem:[%s312 + $0x8] sm:$0xf]
      %v1561 = vld [vmem:[%s312 + $0xc] sm:$0xf]
      %v1562 = vld [vmem:[%s312 + $0x10] sm:$0xf]
      %v1563 = vld [vmem:[%s312 + $0x14] sm:$0xf]
      %v1564 = vld [vmem:[%s312 + $0x18] sm:$0xf]
      %v1565 = vld [vmem:[%s312 + $0x1c] sm:$0xf]
      %v1566 = vunpack.c.l.bf16 %v1558
      %v1567 = vunpack.c.l.bf16 %v1559
      %v1568 = vunpack.c.l.bf16 %v1560
      %v1569 = vunpack.c.l.bf16 %v1561
      %v1570 = vunpack.c.l.bf16 %v1562
      %v1571 = vunpack.c.l.bf16 %v1563
      %v1572 = vunpack.c.l.bf16 %v1564
      %v1573 = vunpack.c.l.bf16 %v1565
      %v1574 = vadd.f32 %v1550, %v1566
      %v1575 = vadd.f32 %v1551, %v1567
      %v1576 = vadd.f32 %v1552, %v1568
      %v1577 = vadd.f32 %v1553, %v1569
      %v1578 = vadd.f32 %v1554, %v1570
      %v1579 = vadd.f32 %v1555, %v1571
      %v1580 = vadd.f32 %v1556, %v1572
      %v1581 = vadd.f32 %v1557, %v1573
      %v1582 = vmax.f32 %v1574, 0.0
      %v1583 = vmax.f32 %v1575, 0.0
      %v1584 = vmax.f32 %v1576, 0.0
      %v1585 = vmax.f32 %v1577, 0.0
      %v1586 = vmax.f32 %v1578, 0.0
      %v1587 = vmax.f32 %v1579, 0.0
      %v1588 = vmax.f32 %v1580, 0.0
      %v1589 = vmax.f32 %v1581, 0.0
      %v1590 = vpack.c.bf16 %v1583, %v1582
      %v1591 = vpack.c.bf16 %v1585, %v1584
      %v1592 = vpack.c.bf16 %v1587, %v1586
      %v1593 = vpack.c.bf16 %v1589, %v1588
      %v1598 = vunpack.c.l.b16 %v1590
      %v1599 = vunpack.c.h.b16 %v1590
      %v1600 = vunpack.c.l.b16 %v1591
      %v1601 = vunpack.c.h.b16 %v1591
      %v1602 = vunpack.c.l.b16 %v1592
      %v1603 = vunpack.c.h.b16 %v1592
      %v1604 = vunpack.c.l.b16 %v1593
      %v1605 = vunpack.c.h.b16 %v1593
      %v1606 = vpack.c.b16 %v1598, %v1598
      %v1607 = vpack.c.b16 %v1599, %v1599
      %v1608 = vpack.c.b16 %v1600, %v1600
      %v1609 = vpack.c.b16 %v1601, %v1601
      %v1610 = vpack.c.b16 %v1602, %v1602
      %v1611 = vpack.c.b16 %v1603, %v1603
      %v1612 = vpack.c.b16 %v1604, %v1604
      %v1613 = vpack.c.b16 %v1605, %v1605
      %1622 = vst [vmem:[%s324] sm:$0xf] %v1606
      %1623 = vst [vmem:[%s324 + $0x4] sm:$0xf] %v1607
      %1624 = vst [vmem:[%s324 + $0x8] sm:$0xf] %v1608
      %1625 = vst [vmem:[%s324 + $0xc] sm:$0xf] %v1609
      %1626 = vst [vmem:[%s324 + $0x10] sm:$0xf] %v1610
      %1627 = vst [vmem:[%s324 + $0x14] sm:$0xf] %v1611
      %1628 = vst [vmem:[%s324 + $0x18] sm:$0xf] %v1612
      %1629 = vst [vmem:[%s324 + $0x1c] sm:$0xf] %v1613
      %p1630 = scmp.lt.s32.totalorder %s20, 1
      %s1631 = scalar_select %p1630, %s20, 1
      %p1632 = scmp.lt.s32.totalorder %s21, 0
      %s1633 = scalar_select %p1632, %s21, 0
      %p1634 = scmp.lt.s32.totalorder %s22, 0
      %s1635 = scalar_select %p1634, %s22, 0
      %s1636 = smul.addr %s1633, 8
      %s1637 = sadd.s32 %s1635, %s1636
      %s1638 = smul.addr %s1631, 8
      %s1639 = sadd.s32 %s1637, %s1638
      %s1640 = smul.addr %s1639, 4
      %s1641 = scalar_lea.vmem %s4, %s1640
      // Predicated region
      $region37: #{_lambda_.5} parent=35 // pred_check
        %p1642 = pneg %p166
      $region38: #{_lambda_.5} parent=35 // pred_check_branch
        %1644 = sbr.rel (%p1642) target = $region40
      $region39: #{_lambda_.5} parent=35 // pred_region
        _
      $region40: #{_lambda_.5} parent=35 // pred_fallthru
        _
    $region36: #{_lambda_.5} parent=5 // pred_fallthru
      _
    %p1645 = scmp.le.s32.totalorder 2, %s10
    // Predicated region
    $region41: #{_lambda_.5} parent=5 // pred_check
      %p1646 = pneg %p1645
    $region42: #{_lambda_.5} parent=5 // pred_check_branch
      %1648 = sbr.rel (%p1646) target = $region44
    $region43: #{_lambda_.5} parent=5 // pred_region
      %s1649 = ssub.s32 %s10, 2
      // Predicated region
      $region45: #{_lambda_.5} parent=43 // pred_check
        %p1650 = pneg %p172
      $region46: #{_lambda_.5} parent=43 // pred_check_branch
        %1652 = sbr.rel (%p1650) target = $region48
      $region47: #{_lambda_.5} parent=43 // pred_region
        %p1653 = scmp.lt.s32.totalorder %s23, 1
        %s1654 = scalar_select %p1653, %s23, 1
        %p1655 = scmp.lt.s32.totalorder %s24, 0
        %s1656 = scalar_select %p1655, %s24, 0
        %p1657 = scmp.lt.s32.totalorder %s25, 0
        %s1658 = scalar_select %p1657, %s25, 0
        %s1659 = smul.addr %s1656, 8
        %s1660 = sadd.s32 %s1658, %s1659
        %s1661 = smul.addr %s1654, 8
        %s1662 = sadd.s32 %s1660, %s1661
        %s1663 = smul.addr %s1662, 4
        %s1664 = scalar_lea.vmem %s4, %s1663
      $region48: #{_lambda_.5} parent=43 // pred_fallthru
        _
    $region44: #{_lambda_.5} parent=5 // pred_fallthru
      _
  $region6: #{_lambda_.5} parent=0 // loop_footer
    %s14 = sadd.s32 1, %s10
  $region7: #{_lambda_.5} parent=0 // loop_footer_branch
    %9 = sbr.rel target = $region3
  $region8: #{_lambda_.5} parent=0 // loop_exit
    _

</llo_original>
